<compile_context>
chip_gen: v7x
topology: tpu7x:2x2x1
jax: 0.10.0
libtpu: 0.0.40
codegen_flags: <defaults>
</compile_context>

<pallas_src>
import jax
import jax.numpy as jnp
import numpy as np
from jax import lax
from jax.experimental import pallas as pl
from jax.experimental.pallas import tpu as pltpu

LANE = 128          # lane width: each gate gets its own 128-lane block
SUBLANE = 8         # sublane minimum for the batch dim


# ----------------------------- Pallas kernel ------------------------------- #
def gru_kernel(x_ref, h0_ref, wih_ref, whh_ref, bx_ref, bhn_ref, out_ref,
               h_carry, gx_scr):
    """One T-chunk of the GRU recurrence.

    x_ref   : (CT*B, I)      time-major inputs for this chunk (batch padded)
    h0_ref  : (B, Hp)        initial hidden state (padded), used at chunk 0
    wih_ref : (I, 3*Hp)      fused input->hidden weights  [r | z | n], lane-padded
    whh_ref : (Hp, 3*Hp)     fused hidden->hidden weights [r | z | n], lane-padded
    bx_ref  : (1, 3*Hp)      folded biases [b_ir+b_hr | b_iz+b_hz | b_in]
    bhn_ref : (1, Hp)        b_hn (must stay inside r * (.))
    out_ref : (CT, B, Hp)    per-step hidden states for this chunk (lane-dense)
    h_carry : VMEM (B, Hp)   hidden state carried across grid iterations
    gx_scr  : VMEM (CT*B, 3*Hp) hoisted input projection for this chunk
    """
    CT, B, Hp = out_ref.shape

    @pl.when(pl.program_id(0) == 0)
    def _():
        h_carry[...] = h0_ref[...].astype(jnp.float32)

    # Hoisted input projection for the whole chunk: one fused MXU matmul.
    gx_scr[...] = (
        jnp.dot(x_ref[...].astype(jnp.float32),
                wih_ref[...].astype(jnp.float32),
                preferred_element_type=jnp.float32)
        + bx_ref[...].astype(jnp.float32)
    )

    # Loop-invariant values hoisted out of the recurrence.
    whh = whh_ref[...].astype(jnp.float32)                               # (Hp, 3Hp)
    b_hn = jnp.broadcast_to(bhn_ref[...].astype(jnp.float32), (B, Hp))   # (B, Hp)

    def step(t, h):
        start = pl.multiple_of(t * B, B)
        gx_t = gx_scr[pl.ds(start, B), :]                                # (B, 3Hp)
        gh = jnp.dot(h, whh, preferred_element_type=jnp.float32)         # (B, 3Hp)

        # 128-lane-aligned gate blocks -> slices are free tile views.
        r = jax.nn.sigmoid(gx_t[:, 0:Hp] + gh[:, 0:Hp])
        z = jax.nn.sigmoid(gx_t[:, Hp:2 * Hp] + gh[:, Hp:2 * Hp])
        n = jnp.tanh(gx_t[:, 2 * Hp:] + r * (gh[:, 2 * Hp:] + b_hn))
        h_new = n + z * (h - n)                                          # == (1-z)*n + z*h

        out_ref[t] = h_new.astype(out_ref.dtype)                         # unmasked vst
        return h_new

    h_final = lax.fori_loop(0, CT, step, h_carry[...], unroll=min(CT, 8))
    h_carry[...] = h_final


# ------------------------------- Wrapper ------------------------------------ #
def _pad_last(a, target):
    return jnp.pad(a, [(0, 0)] * (a.ndim - 1) + [(0, target - a.shape[-1])])


def encoder_rnn_forward(x_btI, h0_lbh, wih, whh, bih, bhh, *, chunk_t=4):
    """EncoderRNN.forward(input, hidden) -> (output, hidden).

    x_btI : (B, T, I)   batch_first input (PyTorch convention)
    h0_lbh: (1, B, H)   initial hidden (n_layers=1)
    wih   : (3, I, H)  whh: (3, H, H)  bih/bhh: (3, 1, H)   gate order [r, z, n]
    Returns: output (B, T, H), hidden (1, B, H)
    """
    B, T, I = x_btI.shape
    H = whh.shape[-1]
    B_pad = max(SUBLANE, ((B + SUBLANE - 1) // SUBLANE) * SUBLANE)
    Hp = max(LANE, ((H + LANE - 1) // LANE) * LANE)     # each gate -> own lane block(s)
    CT = max(1, int(chunk_t))
    n_chunks = pl.cdiv(T, CT)
    T_pad = n_chunks * CT

    # Fused, lane-padded gate layouts [r | z | n] and folded biases.
    wih_f = jnp.concatenate([_pad_last(wih[g], Hp) for g in range(3)], axis=-1)   # (I, 3Hp)
    whh_f = jnp.concatenate(
        [jnp.pad(whh[g], ((0, Hp - H), (0, Hp - H))) for g in range(3)], axis=-1)  # (Hp, 3Hp)
    bx = jnp.concatenate([_pad_last(bih[0] + bhh[0], Hp),
                          _pad_last(bih[1] + bhh[1], Hp),
                          _pad_last(bih[2], Hp)], axis=-1)                          # (1, 3Hp)
    bhn = _pad_last(bhh[2], Hp)                                                     # (1, Hp)

    # Time-major, batch/time-padded, flattened for the per-chunk input projection.
    x_tbI = jnp.transpose(x_btI, (1, 0, 2))                                         # (T, B, I)
    x_tbI = jnp.pad(x_tbI, ((0, T_pad - T), (0, B_pad - B), (0, 0)))
    x2d = x_tbI.reshape(T_pad * B_pad, I)
    h0 = jnp.pad(h0_lbh[0], ((0, B_pad - B), (0, Hp - H)))                          # (B_pad, Hp)

    out_tbh = pl.pallas_call(
        gru_kernel,
        out_shape=jax.ShapeDtypeStruct((T_pad, B_pad, Hp), x_btI.dtype),
        grid_spec=pltpu.PrefetchScalarGridSpec(
            num_scalar_prefetch=0,
            grid=(n_chunks,),
            in_specs=[
                pl.BlockSpec((CT * B_pad, I), lambda t: (t, 0)),        # x chunk (pipelined)
                pl.BlockSpec((B_pad, Hp), lambda t: (0, 0)),            # h0 (resident)
                pl.BlockSpec((I, 3 * Hp), lambda t: (0, 0)),            # W_ih fused (resident)
                pl.BlockSpec((Hp, 3 * Hp), lambda t: (0, 0)),           # W_hh fused (resident)
                pl.BlockSpec((1, 3 * Hp), lambda t: (0, 0)),            # folded bias
                pl.BlockSpec((1, Hp), lambda t: (0, 0)),                # b_hn
            ],
            out_specs=pl.BlockSpec((CT, B_pad, Hp), lambda t: (t, 0, 0)),  # out chunk
            scratch_shapes=[
                pltpu.VMEM((B_pad, Hp), jnp.float32),                   # carried hidden
                pltpu.VMEM((CT * B_pad, 3 * Hp), jnp.float32),          # chunk input proj
            ],
        ),
        compiler_params=pltpu.CompilerParams(
            dimension_semantics=("arbitrary",),       # chunks are sequential (h carried)
            vmem_limit_bytes=48 * 1024 * 1024,        # safe on v5e/v6e/v7x
        ),
    )(x2d, h0, wih_f, whh_f, bx, bhn)

    output = jnp.transpose(out_tbh[:T, :B, :H], (1, 0, 2))   # (B, T, H) batch_first
    hidden = out_tbh[T - 1, :B, :H][None]                    # (1, B, H) == last real step
    return output, hidden


# --------------------------- Pure-JAX reference ----------------------------- #
def gru_reference(x_btI, h0_lbh, wih, whh, bih, bhh):
    h = h0_lbh[0].astype(jnp.float32)

    def step(h, x_t):
        x_t = x_t.astype(jnp.float32)
        rx = x_t @ wih[0] + bih[0]; rh = h @ whh[0] + bhh[0]
        zx = x_t @ wih[1] + bih[1]; zh = h @ whh[1] + bhh[1]
        nx = x_t @ wih[2] + bih[2]; nh = h @ whh[2] + bhh[2]
        r = jax.nn.sigmoid(rx + rh)
        z = jax.nn.sigmoid(zx + zh)
        n = jnp.tanh(nx + r * nh)
        h_new = (1.0 - z) * n + z * h
        return h_new, h_new

    hN, outs = lax.scan(step, h, jnp.transpose(x_btI, (1, 0, 2)))
    return jnp.transpose(outs, (1, 0, 2)), hN[None]


# ---------------------------------- Main ------------------------------------ #
if __name__ == "__main__":
    # EncoderRNN(input_size=16, hidden_size=32, n_layers=1, batch_size=2), T=8.
    B, T, I, H = 2, 8, 16, 32

    key = jax.random.PRNGKey(0)
    k_x, k_wih, k_whh, k_bih, k_bhh = jax.random.split(key, 5)

    # PyTorch GRU init: uniform(-1/sqrt(H), 1/sqrt(H)); gate order [r, z, n].
    bound = 1.0 / np.sqrt(H)
    wih = jax.random.uniform(k_wih, (3, I, H), jnp.float32, -bound, bound)
    whh = jax.random.uniform(k_whh, (3, H, H), jnp.float32, -bound, bound)
    bih = jax.random.uniform(k_bih, (3, 1, H), jnp.float32, -bound, bound)
    bhh = jax.random.uniform(k_bhh, (3, 1, H), jnp.float32, -bound, bound)

    x = jax.random.normal(k_x, (B, T, I), jnp.float32)
    h0 = jnp.zeros((1, B, H), jnp.float32)   # EncoderRNN.initHidden

    out, hN = encoder_rnn_forward(x, h0, wih, whh, bih, bhh, chunk_t=4)
    out, hN = jax.block_until_ready(out), jax.block_until_ready(hN)

    # Sanity check against a pure-JAX GRU reference.
    out_ref, hN_ref = gru_reference(x, h0, wih, whh, bih, bhh)
    np.testing.assert_allclose(np.asarray(out), np.asarray(out_ref), rtol=1e-5, atol=1e-5)
    np.testing.assert_allclose(np.asarray(hN), np.asarray(hN_ref), rtol=1e-5, atol=1e-5)

    print("KERNEL_OK")
</pallas_src>

<mosaic_0001>
module attributes {stable_mosaic.version = 11 : i64} {
  func.func @gru_kernel(%arg0: i32, %arg1: memref<32x16xf32, #tpu.memory_space<vmem>>, %arg2: memref<8x128xf32, #tpu.memory_space<vmem>>, %arg3: memref<16x384xf32, #tpu.memory_space<vmem>>, %arg4: memref<128x384xf32, #tpu.memory_space<vmem>>, %arg5: memref<1x384xf32, #tpu.memory_space<vmem>>, %arg6: memref<1x128xf32, #tpu.memory_space<vmem>>, %arg7: memref<4x8x128xf32, #tpu.memory_space<vmem>>, %arg8: memref<8x128xf32, #tpu.memory_space<vmem>>, %arg9: memref<32x384xf32, #tpu.memory_space<vmem>>) attributes {dimension_semantics = [#tpu.dimension_semantics<arbitrary>], iteration_bounds = array<i64: 2>, scalar_prefetch = 0 : i64, scratch_operands = 2 : i64, tpu.core_type = #tpu.core_type<tc>, window_params = [{transform_indices = @transform_0, window_bounds = array<i64: 32, 16>}, {pipeline_mode = #tpu.pipeline_mode<synchronous>, transform_indices = @transform_1, window_bounds = array<i64: 8, 128>}, {pipeline_mode = #tpu.pipeline_mode<synchronous>, transform_indices = @transform_2, window_bounds = array<i64: 16, 384>}, {pipeline_mode = #tpu.pipeline_mode<synchronous>, transform_indices = @transform_3, window_bounds = array<i64: 128, 384>}, {pipeline_mode = #tpu.pipeline_mode<synchronous>, transform_indices = @transform_4, window_bounds = array<i64: 1, 384>}, {pipeline_mode = #tpu.pipeline_mode<synchronous>, transform_indices = @transform_5, window_bounds = array<i64: 1, 128>}, {transform_indices = @transform_6, window_bounds = array<i64: 4, 8, 128>}]} {
    %c0_i32 = arith.constant 0 : i32
    %0 = arith.cmpi eq, %arg0, %c0_i32 : i32
    %1 = arith.extui %0 : i1 to i32
    %c0_i32_0 = arith.constant 0 : i32
    %2 = arith.cmpi ne, %1, %c0_i32_0 : i32
    scf.if %2 {
      %c0_44 = arith.constant 0 : index
      %c0_45 = arith.constant 0 : index
      %152 = vector.load %arg2[%c0_44, %c0_45] : memref<8x128xf32, #tpu.memory_space<vmem>>, vector<8x128xf32>
      %c0_46 = arith.constant 0 : index
      %c0_47 = arith.constant 0 : index
      %153 = vector.load %arg8[%c0_46, %c0_47] : memref<8x128xf32, #tpu.memory_space<vmem>>, vector<8x128xf32>
      tpu.vector_store %arg8[%c0_46, %c0_47], %152 {strides = array<i32>} : memref<8x128xf32, #tpu.memory_space<vmem>>, vector<8x128xf32>,
    } else {
    }
    %c0 = arith.constant 0 : index
    %c0_1 = arith.constant 0 : index
    %3 = vector.load %arg1[%c0, %c0_1] : memref<32x16xf32, #tpu.memory_space<vmem>>, vector<32x16xf32>
    %c0_2 = arith.constant 0 : index
    %c0_3 = arith.constant 0 : index
    %4 = vector.load %arg3[%c0_2, %c0_3] : memref<16x384xf32, #tpu.memory_space<vmem>>, vector<16x384xf32>
    %cst = arith.constant dense<0.000000e+00> : vector<32x384xf32>
    %5 = tpu.matmul %3, %4, %cst {dimension_numbers = #tpu.dot_dimension_numbers<[1], [0], [0], [1], [0, 0, 1, 1], [], []>} : vector<32x16xf32>, vector<16x384xf32>, vector<32x384xf32> -> vector<32x384xf32>
    %c0_4 = arith.constant 0 : index
    %c0_5 = arith.constant 0 : index
    %6 = vector.load %arg5[%c0_4, %c0_5] : memref<1x384xf32, #tpu.memory_space<vmem>>, vector<1x384xf32>
    %7 = vector.broadcast %6 : vector<1x384xf32> to vector<32x384xf32>
    %8 = arith.addf %5, %7 : vector<32x384xf32>
    %c0_6 = arith.constant 0 : index
    %c0_7 = arith.constant 0 : index
    %9 = vector.load %arg9[%c0_6, %c0_7] : memref<32x384xf32, #tpu.memory_space<vmem>>, vector<32x384xf32>
    tpu.vector_store %arg9[%c0_6, %c0_7], %8 {strides = array<i32>} : memref<32x384xf32, #tpu.memory_space<vmem>>, vector<32x384xf32>,
    %c0_8 = arith.constant 0 : index
    %c0_9 = arith.constant 0 : index
    %10 = vector.load %arg4[%c0_8, %c0_9] : memref<128x384xf32, #tpu.memory_space<vmem>>, vector<128x384xf32>
    %c0_10 = arith.constant 0 : index
    %c0_11 = arith.constant 0 : index
    %11 = vector.load %arg6[%c0_10, %c0_11] : memref<1x128xf32, #tpu.memory_space<vmem>>, vector<1x128xf32>
    %12 = vector.shape_cast %11 : vector<1x128xf32> to vector<1x128xf32>
    %13 = vector.broadcast %12 : vector<1x128xf32> to vector<8x128xf32>
    %c0_12 = arith.constant 0 : index
    %c0_13 = arith.constant 0 : index
    %14 = vector.load %arg8[%c0_12, %c0_13] : memref<8x128xf32, #tpu.memory_space<vmem>>, vector<8x128xf32>
    %c0_i32_14 = arith.constant 0 : i32
    %c8_i32 = arith.constant 8 : i32
    %15 = arith.muli %c0_i32_14, %c8_i32 : i32
    %16 = tpu.assume_multiple %15, 8 : i32
    %17 = arith.index_cast %16 : i32 to index
    %c0_15 = arith.constant 0 : index
    %18 = vector.load %arg9[%17, %c0_15] : memref<32x384xf32, #tpu.memory_space<vmem>>, vector<8x384xf32>
    %cst_16 = arith.constant dense<0.000000e+00> : vector<8x384xf32>
    %19 = tpu.matmul %14, %10, %cst_16 {dimension_numbers = #tpu.dot_dimension_numbers<[1], [0], [0], [1], [0, 0, 1, 1], [], []>} : vector<8x128xf32>, vector<128x384xf32>, vector<8x384xf32> -> vector<8x384xf32>
    %20 = vector.extract_strided_slice %18 {offsets = [0, 0], sizes = [8, 128], strides = [1, 1]} : vector<8x384xf32> to vector<8x128xf32>
    %21 = vector.extract_strided_slice %19 {offsets = [0, 0], sizes = [8, 128], strides = [1, 1]} : vector<8x384xf32> to vector<8x128xf32>
    %22 = arith.addf %20, %21 : vector<8x128xf32>
    %23 = arith.negf %22 : vector<8x128xf32>
    %24 = math.exp %23 : vector<8x128xf32>
    %cst_17 = arith.constant 1.000000e+00 : f32
    %25 = vector.broadcast %cst_17 : f32 to vector<8x128xf32>
    %26 = arith.addf %25, %24 : vector<8x128xf32>
    %27 = arith.divf %25, %26 : vector<8x128xf32>
    %28 = vector.extract_strided_slice %18 {offsets = [0, 128], sizes = [8, 128], strides = [1, 1]} : vector<8x384xf32> to vector<8x128xf32>
    %29 = vector.extract_strided_slice %19 {offsets = [0, 128], sizes = [8, 128], strides = [1, 1]} : vector<8x384xf32> to vector<8x128xf32>
    %30 = arith.addf %28, %29 : vector<8x128xf32>
    %31 = arith.negf %30 : vector<8x128xf32>
    %32 = math.exp %31 : vector<8x128xf32>
    %cst_18 = arith.constant 1.000000e+00 : f32
    %33 = vector.broadcast %cst_18 : f32 to vector<8x128xf32>
    %34 = arith.addf %33, %32 : vector<8x128xf32>
    %35 = arith.divf %33, %34 : vector<8x128xf32>
    %36 = vector.extract_strided_slice %18 {offsets = [0, 256], sizes = [8, 128], strides = [1, 1]} : vector<8x384xf32> to vector<8x128xf32>
    %37 = vector.extract_strided_slice %19 {offsets = [0, 256], sizes = [8, 128], strides = [1, 1]} : vector<8x384xf32> to vector<8x128xf32>
    %38 = arith.addf %37, %13 : vector<8x128xf32>
    %39 = arith.mulf %27, %38 : vector<8x128xf32>
    %40 = arith.addf %36, %39 : vector<8x128xf32>
    %41 = math.tanh %40 : vector<8x128xf32>
    %42 = arith.subf %14, %41 : vector<8x128xf32>
    %43 = arith.mulf %35, %42 : vector<8x128xf32>
    %44 = arith.addf %41, %43 : vector<8x128xf32>
    %45 = arith.index_cast %c0_i32_14 : i32 to index
    %c0_19 = arith.constant 0 : index
    %c0_20 = arith.constant 0 : index
    %46 = vector.load %arg7[%45, %c0_19, %c0_20] : memref<4x8x128xf32, #tpu.memory_space<vmem>>, vector<1x8x128xf32>
    %47 = vector.shape_cast %46 : vector<1x8x128xf32> to vector<8x128xf32>
    %48 = vector.shape_cast %44 : vector<8x128xf32> to vector<1x8x128xf32>
    tpu.vector_store %arg7[%45, %c0_19, %c0_20], %48 {strides = array<i32>} : memref<4x8x128xf32, #tpu.memory_space<vmem>>, vector<1x8x128xf32>,
    %c1_i32 = arith.constant 1 : i32
    %c8_i32_21 = arith.constant 8 : i32
    %49 = arith.muli %c1_i32, %c8_i32_21 : i32
    %50 = tpu.assume_multiple %49, 8 : i32
    %51 = arith.index_cast %50 : i32 to index
    %c0_22 = arith.constant 0 : index
    %52 = vector.load %arg9[%51, %c0_22] : memref<32x384xf32, #tpu.memory_space<vmem>>, vector<8x384xf32>
    %cst_23 = arith.constant dense<0.000000e+00> : vector<8x384xf32>
    %53 = tpu.matmul %44, %10, %cst_23 {dimension_numbers = #tpu.dot_dimension_numbers<[1], [0], [0], [1], [0, 0, 1, 1], [], []>} : vector<8x128xf32>, vector<128x384xf32>, vector<8x384xf32> -> vector<8x384xf32>
    %54 = vector.extract_strided_slice %52 {offsets = [0, 0], sizes = [8, 128], strides = [1, 1]} : vector<8x384xf32> to vector<8x128xf32>
    %55 = vector.extract_strided_slice %53 {offsets = [0, 0], sizes = [8, 128], strides = [1, 1]} : vector<8x384xf32> to vector<8x128xf32>
    %56 = arith.addf %54, %55 : vector<8x128xf32>
    %57 = arith.negf %56 : vector<8x128xf32>
    %58 = math.exp %57 : vector<8x128xf32>
    %cst_24 = arith.constant 1.000000e+00 : f32
    %59 = vector.broadcast %cst_24 : f32 to vector<8x128xf32>
    %60 = arith.addf %59, %58 : vector<8x128xf32>
    %61 = arith.divf %59, %60 : vector<8x128xf32>
    %62 = vector.extract_strided_slice %52 {offsets = [0, 128], sizes = [8, 128], strides = [1, 1]} : vector<8x384xf32> to vector<8x128xf32>
    %63 = vector.extract_strided_slice %53 {offsets = [0, 128], sizes = [8, 128], strides = [1, 1]} : vector<8x384xf32> to vector<8x128xf32>
    %64 = arith.addf %62, %63 : vector<8x128xf32>
    %65 = arith.negf %64 : vector<8x128xf32>
    %66 = math.exp %65 : vector<8x128xf32>
    %cst_25 = arith.constant 1.000000e+00 : f32
    %67 = vector.broadcast %cst_25 : f32 to vector<8x128xf32>
    %68 = arith.addf %67, %66 : vector<8x128xf32>
    %69 = arith.divf %67, %68 : vector<8x128xf32>
    %70 = vector.extract_strided_slice %52 {offsets = [0, 256], sizes = [8, 128], strides = [1, 1]} : vector<8x384xf32> to vector<8x128xf32>
    %71 = vector.extract_strided_slice %53 {offsets = [0, 256], sizes = [8, 128], strides = [1, 1]} : vector<8x384xf32> to vector<8x128xf32>
    %72 = arith.addf %71, %13 : vector<8x128xf32>
    %73 = arith.mulf %61, %72 : vector<8x128xf32>
    %74 = arith.addf %70, %73 : vector<8x128xf32>
    %75 = math.tanh %74 : vector<8x128xf32>
    %76 = arith.subf %44, %75 : vector<8x128xf32>
    %77 = arith.mulf %69, %76 : vector<8x128xf32>
    %78 = arith.addf %75, %77 : vector<8x128xf32>
    %79 = arith.index_cast %c1_i32 : i32 to index
    %c0_26 = arith.constant 0 : index
    %c0_27 = arith.constant 0 : index
    %80 = vector.load %arg7[%79, %c0_26, %c0_27] : memref<4x8x128xf32, #tpu.memory_space<vmem>>, vector<1x8x128xf32>
    %81 = vector.shape_cast %80 : vector<1x8x128xf32> to vector<8x128xf32>
    %82 = vector.shape_cast %78 : vector<8x128xf32> to vector<1x8x128xf32>
    tpu.vector_store %arg7[%79, %c0_26, %c0_27], %82 {strides = array<i32>} : memref<4x8x128xf32, #tpu.memory_space<vmem>>, vector<1x8x128xf32>,
    %c2_i32 = arith.constant 2 : i32
    %c8_i32_28 = arith.constant 8 : i32
    %83 = arith.muli %c2_i32, %c8_i32_28 : i32
    %84 = tpu.assume_multiple %83, 8 : i32
    %85 = arith.index_cast %84 : i32 to index
    %c0_29 = arith.constant 0 : index
    %86 = vector.load %arg9[%85, %c0_29] : memref<32x384xf32, #tpu.memory_space<vmem>>, vector<8x384xf32>
    %cst_30 = arith.constant dense<0.000000e+00> : vector<8x384xf32>
    %87 = tpu.matmul %78, %10, %cst_30 {dimension_numbers = #tpu.dot_dimension_numbers<[1], [0], [0], [1], [0, 0, 1, 1], [], []>} : vector<8x128xf32>, vector<128x384xf32>, vector<8x384xf32> -> vector<8x384xf32>
    %88 = vector.extract_strided_slice %86 {offsets = [0, 0], sizes = [8, 128], strides = [1, 1]} : vector<8x384xf32> to vector<8x128xf32>
    %89 = vector.extract_strided_slice %87 {offsets = [0, 0], sizes = [8, 128], strides = [1, 1]} : vector<8x384xf32> to vector<8x128xf32>
    %90 = arith.addf %88, %89 : vector<8x128xf32>
    %91 = arith.negf %90 : vector<8x128xf32>
    %92 = math.exp %91 : vector<8x128xf32>
    %cst_31 = arith.constant 1.000000e+00 : f32
    %93 = vector.broadcast %cst_31 : f32 to vector<8x128xf32>
    %94 = arith.addf %93, %92 : vector<8x128xf32>
    %95 = arith.divf %93, %94 : vector<8x128xf32>
    %96 = vector.extract_strided_slice %86 {offsets = [0, 128], sizes = [8, 128], strides = [1, 1]} : vector<8x384xf32> to vector<8x128xf32>
    %97 = vector.extract_strided_slice %87 {offsets = [0, 128], sizes = [8, 128], strides = [1, 1]} : vector<8x384xf32> to vector<8x128xf32>
    %98 = arith.addf %96, %97 : vector<8x128xf32>
    %99 = arith.negf %98 : vector<8x128xf32>
    %100 = math.exp %99 : vector<8x128xf32>
    %cst_32 = arith.constant 1.000000e+00 : f32
    %101 = vector.broadcast %cst_32 : f32 to vector<8x128xf32>
    %102 = arith.addf %101, %100 : vector<8x128xf32>
    %103 = arith.divf %101, %102 : vector<8x128xf32>
    %104 = vector.extract_strided_slice %86 {offsets = [0, 256], sizes = [8, 128], strides = [1, 1]} : vector<8x384xf32> to vector<8x128xf32>
    %105 = vector.extract_strided_slice %87 {offsets = [0, 256], sizes = [8, 128], strides = [1, 1]} : vector<8x384xf32> to vector<8x128xf32>
    %106 = arith.addf %105, %13 : vector<8x128xf32>
    %107 = arith.mulf %95, %106 : vector<8x128xf32>
    %108 = arith.addf %104, %107 : vector<8x128xf32>
    %109 = math.tanh %108 : vector<8x128xf32>
    %110 = arith.subf %78, %109 : vector<8x128xf32>
    %111 = arith.mulf %103, %110 : vector<8x128xf32>
    %112 = arith.addf %109, %111 : vector<8x128xf32>
    %113 = arith.index_cast %c2_i32 : i32 to index
    %c0_33 = arith.constant 0 : index
    %c0_34 = arith.constant 0 : index
    %114 = vector.load %arg7[%113, %c0_33, %c0_34] : memref<4x8x128xf32, #tpu.memory_space<vmem>>, vector<1x8x128xf32>
    %115 = vector.shape_cast %114 : vector<1x8x128xf32> to vector<8x128xf32>
    %116 = vector.shape_cast %112 : vector<8x128xf32> to vector<1x8x128xf32>
    tpu.vector_store %arg7[%113, %c0_33, %c0_34], %116 {strides = array<i32>} : memref<4x8x128xf32, #tpu.memory_space<vmem>>, vector<1x8x128xf32>,
    %c3_i32 = arith.constant 3 : i32
    %c8_i32_35 = arith.constant 8 : i32
    %117 = arith.muli %c3_i32, %c8_i32_35 : i32
    %118 = tpu.assume_multiple %117, 8 : i32
    %119 = arith.index_cast %118 : i32 to index
    %c0_36 = arith.constant 0 : index
    %120 = vector.load %arg9[%119, %c0_36] : memref<32x384xf32, #tpu.memory_space<vmem>>, vector<8x384xf32>
    %cst_37 = arith.constant dense<0.000000e+00> : vector<8x384xf32>
    %121 = tpu.matmul %112, %10, %cst_37 {dimension_numbers = #tpu.dot_dimension_numbers<[1], [0], [0], [1], [0, 0, 1, 1], [], []>} : vector<8x128xf32>, vector<128x384xf32>, vector<8x384xf32> -> vector<8x384xf32>
    %122 = vector.extract_strided_slice %120 {offsets = [0, 0], sizes = [8, 128], strides = [1, 1]} : vector<8x384xf32> to vector<8x128xf32>
    %123 = vector.extract_strided_slice %121 {offsets = [0, 0], sizes = [8, 128], strides = [1, 1]} : vector<8x384xf32> to vector<8x128xf32>
    %124 = arith.addf %122, %123 : vector<8x128xf32>
    %125 = arith.negf %124 : vector<8x128xf32>
    %126 = math.exp %125 : vector<8x128xf32>
    %cst_38 = arith.constant 1.000000e+00 : f32
    %127 = vector.broadcast %cst_38 : f32 to vector<8x128xf32>
    %128 = arith.addf %127, %126 : vector<8x128xf32>
    %129 = arith.divf %127, %128 : vector<8x128xf32>
    %130 = vector.extract_strided_slice %120 {offsets = [0, 128], sizes = [8, 128], strides = [1, 1]} : vector<8x384xf32> to vector<8x128xf32>
    %131 = vector.extract_strided_slice %121 {offsets = [0, 128], sizes = [8, 128], strides = [1, 1]} : vector<8x384xf32> to vector<8x128xf32>
    %132 = arith.addf %130, %131 : vector<8x128xf32>
    %133 = arith.negf %132 : vector<8x128xf32>
    %134 = math.exp %133 : vector<8x128xf32>
    %cst_39 = arith.constant 1.000000e+00 : f32
    %135 = vector.broadcast %cst_39 : f32 to vector<8x128xf32>
    %136 = arith.addf %135, %134 : vector<8x128xf32>
    %137 = arith.divf %135, %136 : vector<8x128xf32>
    %138 = vector.extract_strided_slice %120 {offsets = [0, 256], sizes = [8, 128], strides = [1, 1]} : vector<8x384xf32> to vector<8x128xf32>
    %139 = vector.extract_strided_slice %121 {offsets = [0, 256], sizes = [8, 128], strides = [1, 1]} : vector<8x384xf32> to vector<8x128xf32>
    %140 = arith.addf %139, %13 : vector<8x128xf32>
    %141 = arith.mulf %129, %140 : vector<8x128xf32>
    %142 = arith.addf %138, %141 : vector<8x128xf32>
    %143 = math.tanh %142 : vector<8x128xf32>
    %144 = arith.subf %112, %143 : vector<8x128xf32>
    %145 = arith.mulf %137, %144 : vector<8x128xf32>
    %146 = arith.addf %143, %145 : vector<8x128xf32>
    %147 = arith.index_cast %c3_i32 : i32 to index
    %c0_40 = arith.constant 0 : index
    %c0_41 = arith.constant 0 : index
    %148 = vector.load %arg7[%147, %c0_40, %c0_41] : memref<4x8x128xf32, #tpu.memory_space<vmem>>, vector<1x8x128xf32>
    %149 = vector.shape_cast %148 : vector<1x8x128xf32> to vector<8x128xf32>
    %150 = vector.shape_cast %146 : vector<8x128xf32> to vector<1x8x128xf32>
    tpu.vector_store %arg7[%147, %c0_40, %c0_41], %150 {strides = array<i32>} : memref<4x8x128xf32, #tpu.memory_space<vmem>>, vector<1x8x128xf32>,
    %c4_i32 = arith.constant 4 : i32
    %c0_42 = arith.constant 0 : index
    %c0_43 = arith.constant 0 : index
    %151 = vector.load %arg8[%c0_42, %c0_43] : memref<8x128xf32, #tpu.memory_space<vmem>>, vector<8x128xf32>
    tpu.vector_store %arg8[%c0_42, %c0_43], %146 {strides = array<i32>} : memref<8x128xf32, #tpu.memory_space<vmem>>, vector<8x128xf32>,
    return
  }
  func.func @transform_0(%arg0: i32) -> (i32, i32) {
    %c0_i32 = arith.constant 0 : i32
    %c0_i32_0 = arith.constant 0 : i32
    return %arg0, %c0_i32 : i32, i32
  }
  func.func @transform_1(%arg0: i32) -> (i32, i32) {
    %c0_i32 = arith.constant 0 : i32
    %c0_i32_0 = arith.constant 0 : i32
    %c0_i32_1 = arith.constant 0 : i32
    return %c0_i32, %c0_i32_0 : i32, i32
  }
  func.func @transform_2(%arg0: i32) -> (i32, i32) {
    %c0_i32 = arith.constant 0 : i32
    %c0_i32_0 = arith.constant 0 : i32
    %c0_i32_1 = arith.constant 0 : i32
    return %c0_i32, %c0_i32_0 : i32, i32
  }
  func.func @transform_3(%arg0: i32) -> (i32, i32) {
    %c0_i32 = arith.constant 0 : i32
    %c0_i32_0 = arith.constant 0 : i32
    %c0_i32_1 = arith.constant 0 : i32
    return %c0_i32, %c0_i32_0 : i32, i32
  }
  func.func @transform_4(%arg0: i32) -> (i32, i32) {
    %c0_i32 = arith.constant 0 : i32
    %c0_i32_0 = arith.constant 0 : i32
    %c0_i32_1 = arith.constant 0 : i32
    return %c0_i32, %c0_i32_0 : i32, i32
  }
  func.func @transform_5(%arg0: i32) -> (i32, i32) {
    %c0_i32 = arith.constant 0 : i32
    %c0_i32_0 = arith.constant 0 : i32
    %c0_i32_1 = arith.constant 0 : i32
    return %c0_i32, %c0_i32_0 : i32, i32
  }
  func.func @transform_6(%arg0: i32) -> (i32, i32, i32) {
    %c0_i32 = arith.constant 0 : i32
    %c0_i32_0 = arith.constant 0 : i32
    %c0_i32_1 = arith.constant 0 : i32
    return %arg0, %c0_i32, %c0_i32_0 : i32, i32, i32
  }
}

</mosaic_0001>

<llo_original>
// kernel: tpu_custom_call.1
$region0: #{tpu_custom_call.1}
  #allocation0 [shape = 'u32[]', space=smem, size = 0x4, offset = 0x4, fixed_abs, tag = 'smem constant byte address 0x4 - core index']
  #allocation1 [shape = 'u32[144,128]{1,0:T(1,128)}', space=vmem, size = 0x12000, scoped, tag = 'internal scratch']
  #allocation2 [shape = 'f32[8,128]{1,0:T(8,128)}', space=vmem, size = 0x1000, scoped, tag = 'scratch operand']
  #allocation3 [shape = 'f32[32,384]{1,0:T(8,128)}', space=vmem, size = 0xc000, scoped, tag = 'scratch operand']
  %s0 = inlined_call_operand.vmem [shape: f32[64,16], index: 0, kind: input, shape index: {}]
  %s1 = inlined_call_operand.vmem [shape: f32[8,128], index: 1, kind: input, shape index: {}]
  %s2 = inlined_call_operand.vmem [shape: f32[16,384], index: 2, kind: input, shape index: {}]
  %s3 = inlined_call_operand.hbm [shape: f32[128,384], index: 3, kind: input, shape index: {}]
  %s4 = inlined_call_operand.vmem [shape: f32[1,384], index: 4, kind: input, shape index: {}]
  %s5 = inlined_call_operand.vmem [shape: f32[1,128], index: 5, kind: input, shape index: {}]
  %s6 = inlined_call_operand.hbm [shape: f32[8,8,128], index: 6, kind: output, shape index: {}]
  %s7 = sld [smem:[#allocation0]]
  $region65: #{tpu_custom_call.1} parent=0
    _
  %s9 = ssub.s32 1, %s7
  %s10 = scalar_select 0, %s9, %s7
  $region1: #{tpu_custom_call.1} parent=0
    #allocation4 [shape = 'u8[196608]{0}', space=vmem, size = 0x30000, scoped, tag = 'input window, operand 3, single buffered']
    #allocation5 [shape = 's32[2]{0}', space=sflag, size = 0x8, scoped, tag = 'scoped memory for tpu_custom_call.1']
    #allocation6 [shape = 's32[2]{0}', space=sflag, size = 0x8, scoped, tag = 'scoped memory for tpu_custom_call.1']
    #allocation7 [shape = 'u8[32768]{0}', space=vmem, size = 0x8000, scoped, tag = 'output window, operand 0']
    %11 = vsyncpa [#allocation5], 0
    %12 = vsyncpa [#allocation6], 0
    %s13 = scalar_lea.sflag [#allocation6], 1
    %14 = vsyncpa %s13, 0
    loop: start=0, step=1, limit=4
    $region2: #{tpu_custom_call.1} parent=1 // loop_pre_header
      _
    $region3: #{tpu_custom_call.1} parent=1 // loop_header
      %s16 = sphi 0, %s20
      %p17 = scmp.ge.s32.totalorder %s16, 4
      %s26 = sphi 0, %s28
      %s29 = sphi 0, %s26
      %s30 = sphi 0, %s29
      %s46 = sphi 0, %s30
      %s50 = sphi 0, %s50
      %s52 = sphi 0, %s50
      %s53 = sphi 0, %s52
      %s67 = sphi 0, %s53
      %s71 = sphi 0, %s71
      %s73 = sphi 0, %s71
      %s74 = sphi 0, %s73
      %s88 = sphi 0, %s74
      %s92 = sphi 0, %s92
      %s94 = sphi 0, %s92
      %s95 = sphi 0, %s94
      %s109 = sphi 0, %s95
      %s113 = sphi 0, %s113
      %s115 = sphi 0, %s113
      %s116 = sphi 0, %s115
      %s130 = sphi 0, %s116
      %s134 = sphi 0, %s134
      %s136 = sphi 0, %s134
      %s137 = sphi 0, %s136
      %s151 = sphi 0, %s137
      %s157 = sphi 0, %s159
      %s160 = sphi 0, %s157
      %s161 = sphi 0, %s160
      %s177 = sphi 0, %s161
    $region4: #{tpu_custom_call.1} parent=1 // loop_header_branch
      %19 = sbr.rel (%p17) target = $region8
    $region5: #{tpu_custom_call.1} parent=1 // loop_body
      %s21 = ssub.s32 %s16, 1
      %s22 = ssub.s32 %s16, 2
      %s23 = sadd.s32 %s16, 1
      %s24 = ssub.s32 %s16, %s23
      %p25 = scmp.eq.s32.totalorder %s24, 0
      %s27 = sadd.s32 %s26, 1
      %s28 = scalar_select %p25, %s26, %s27
      %p31 = pneg %p25
      %p32 = scmp.eq.s32.totalorder %s16, 1
      %p33 = por %p31, %p32
      %p34 = scmp.ne.s32.totalorder %s26, %s29
      %p35 = scmp.eq.s32.totalorder %s16, 0
      %p36 = por %p34, %p35
      %p37 = scmp.ne.s32.totalorder %s26, %s29
      %p38 = scmp.eq.s32.totalorder %s21, 1
      %p39 = por %p37, %p38
      %p40 = scmp.ne.s32.totalorder %s29, %s30
      %p41 = scmp.eq.s32.totalorder %s21, 0
      %p42 = por %p40, %p41
      %p43 = scmp.ne.s32.totalorder %s29, %s30
      %p44 = scmp.eq.s32.totalorder %s22, 1
      %p45 = por %p43, %p44
      %p47 = scmp.ne.s32.totalorder %s30, %s46
      %p48 = scmp.eq.s32.totalorder %s22, 0
      %p49 = por %p47, %p48
      %s51 = sadd.s32 %s50, 1
      %p54 = scmp.eq.s32.totalorder %s16, 1
      %p55 = scmp.ne.s32.totalorder %s50, %s52
      %p56 = scmp.eq.s32.totalorder %s16, 0
      %p57 = por %p55, %p56
      %p58 = scmp.ne.s32.totalorder %s50, %s52
      %p59 = scmp.eq.s32.totalorder %s21, 1
      %p60 = por %p58, %p59
      %p61 = scmp.ne.s32.totalorder %s52, %s53
      %p62 = scmp.eq.s32.totalorder %s21, 0
      %p63 = por %p61, %p62
      %p64 = scmp.ne.s32.totalorder %s52, %s53
      %p65 = scmp.eq.s32.totalorder %s22, 1
      %p66 = por %p64, %p65
      %p68 = scmp.ne.s32.totalorder %s53, %s67
      %p69 = scmp.eq.s32.totalorder %s22, 0
      %p70 = por %p68, %p69
      %s72 = sadd.s32 %s71, 1
      %p75 = scmp.eq.s32.totalorder %s16, 1
      %p76 = scmp.ne.s32.totalorder %s71, %s73
      %p77 = scmp.eq.s32.totalorder %s16, 0
      %p78 = por %p76, %p77
      %p79 = scmp.ne.s32.totalorder %s71, %s73
      %p80 = scmp.eq.s32.totalorder %s21, 1
      %p81 = por %p79, %p80
      %p82 = scmp.ne.s32.totalorder %s73, %s74
      %p83 = scmp.eq.s32.totalorder %s21, 0
      %p84 = por %p82, %p83
      %p85 = scmp.ne.s32.totalorder %s73, %s74
      %p86 = scmp.eq.s32.totalorder %s22, 1
      %p87 = por %p85, %p86
      %p89 = scmp.ne.s32.totalorder %s74, %s88
      %p90 = scmp.eq.s32.totalorder %s22, 0
      %p91 = por %p89, %p90
      %s93 = sadd.s32 %s92, 1
      %p96 = scmp.eq.s32.totalorder %s16, 1
      %p97 = scmp.ne.s32.totalorder %s92, %s94
      %p98 = scmp.eq.s32.totalorder %s16, 0
      %p99 = por %p97, %p98
      %p100 = scmp.ne.s32.totalorder %s92, %s94
      %p101 = scmp.eq.s32.totalorder %s21, 1
      %p102 = por %p100, %p101
      %p103 = scmp.ne.s32.totalorder %s94, %s95
      %p104 = scmp.eq.s32.totalorder %s21, 0
      %p105 = por %p103, %p104
      %p106 = scmp.ne.s32.totalorder %s94, %s95
      %p107 = scmp.eq.s32.totalorder %s22, 1
      %p108 = por %p106, %p107
      %p110 = scmp.ne.s32.totalorder %s95, %s109
      %p111 = scmp.eq.s32.totalorder %s22, 0
      %p112 = por %p110, %p111
      %s114 = sadd.s32 %s113, 1
      %p117 = scmp.eq.s32.totalorder %s16, 1
      %p118 = scmp.ne.s32.totalorder %s113, %s115
      %p119 = scmp.eq.s32.totalorder %s16, 0
      %p120 = por %p118, %p119
      %p121 = scmp.ne.s32.totalorder %s113, %s115
      %p122 = scmp.eq.s32.totalorder %s21, 1
      %p123 = por %p121, %p122
      %p124 = scmp.ne.s32.totalorder %s115, %s116
      %p125 = scmp.eq.s32.totalorder %s21, 0
      %p126 = por %p124, %p125
      %p127 = scmp.ne.s32.totalorder %s115, %s116
      %p128 = scmp.eq.s32.totalorder %s22, 1
      %p129 = por %p127, %p128
      %p131 = scmp.ne.s32.totalorder %s116, %s130
      %p132 = scmp.eq.s32.totalorder %s22, 0
      %p133 = por %p131, %p132
      %s135 = sadd.s32 %s134, 1
      %p138 = scmp.eq.s32.totalorder %s16, 1
      %p139 = scmp.ne.s32.totalorder %s134, %s136
      %p140 = scmp.eq.s32.totalorder %s16, 0
      %p141 = por %p139, %p140
      %p142 = scmp.ne.s32.totalorder %s134, %s136
      %p143 = scmp.eq.s32.totalorder %s21, 1
      %p144 = por %p142, %p143
      %p145 = scmp.ne.s32.totalorder %s136, %s137
      %p146 = scmp.eq.s32.totalorder %s21, 0
      %p147 = por %p145, %p146
      %p148 = scmp.ne.s32.totalorder %s136, %s137
      %p149 = scmp.eq.s32.totalorder %s22, 1
      %p150 = por %p148, %p149
      %p152 = scmp.ne.s32.totalorder %s137, %s151
      %p153 = scmp.eq.s32.totalorder %s22, 0
      %p154 = por %p152, %p153
      %s155 = ssub.s32 %s16, %s23
      %p156 = scmp.eq.s32.totalorder %s155, 0
      %s158 = sadd.s32 %s157, 1
      %s159 = scalar_select %p156, %s157, %s158
      %p162 = pneg %p156
      %p163 = scmp.eq.s32.totalorder %s16, 1
      %p164 = por %p162, %p163
      %p165 = scmp.ne.s32.totalorder %s157, %s160
      %p166 = scmp.eq.s32.totalorder %s16, 0
      %p167 = por %p165, %p166
      %p168 = scmp.ne.s32.totalorder %s157, %s160
      %p169 = scmp.eq.s32.totalorder %s21, 1
      %p170 = por %p168, %p169
      %p171 = scmp.ne.s32.totalorder %s160, %s161
      %p172 = scmp.eq.s32.totalorder %s21, 0
      %p173 = por %p171, %p172
      %p174 = scmp.ne.s32.totalorder %s160, %s161
      %p175 = scmp.eq.s32.totalorder %s22, 1
      %p176 = por %p174, %p175
      %p178 = scmp.ne.s32.totalorder %s161, %s177
      %p179 = scmp.eq.s32.totalorder %s22, 0
      %p180 = por %p178, %p179
      %p181 = scmp.le.s32.totalorder 1, %s16
      %p182 = scmp.lt.s32.totalorder %s16, 3
      %p183 = pnand %p181, %p182
      %p184 = pneg %p183
      // Predicated region
      $region9: #{tpu_custom_call.1} parent=5 // pred_check
        _
      $region10: #{tpu_custom_call.1} parent=5 // pred_check_branch
        %186 = sbr.rel (%p183) target = $region12
      $region11: #{tpu_custom_call.1} parent=5 // pred_region
        %s187 = ssub.s32 %s16, 1
        // Predicated region
        $region13: #{tpu_custom_call.1} parent=11 // pred_check
          %p188 = pneg %p63
        $region14: #{tpu_custom_call.1} parent=11 // pred_check_branch
          %190 = sbr.rel (%p188) target = $region16
        $region15: #{tpu_custom_call.1} parent=11 // pred_region
          _
        $region16: #{tpu_custom_call.1} parent=11 // pred_fallthru
          _
        // Predicated region
        $region17: #{tpu_custom_call.1} parent=11 // pred_check
          %p191 = pneg %p84
        $region18: #{tpu_custom_call.1} parent=11 // pred_check_branch
          %193 = sbr.rel (%p191) target = $region20
        $region19: #{tpu_custom_call.1} parent=11 // pred_region
          _
        $region20: #{tpu_custom_call.1} parent=11 // pred_fallthru
          _
        // Predicated region
        $region21: #{tpu_custom_call.1} parent=11 // pred_check
          %p194 = pneg %p105
        $region22: #{tpu_custom_call.1} parent=11 // pred_check_branch
          %196 = sbr.rel (%p194) target = $region24
        $region23: #{tpu_custom_call.1} parent=11 // pred_region
          %s198 = ssub.s32 6144, 6144
          %199 = vsyncadd [#allocation5], %s198
          %s200 = sshll.u32 [#allocation4], 4
          %s201 = int_to_ptr.vmem [resolvable:$true] %s200
          %206 = dma.hbm_to_vmem [thread:$0]  %s3, 6144, %s201, [#allocation5], 384, 384, 24
        $region24: #{tpu_custom_call.1} parent=11 // pred_fallthru
          _
        // Predicated region
        $region25: #{tpu_custom_call.1} parent=11 // pred_check
          %p207 = pneg %p126
        $region26: #{tpu_custom_call.1} parent=11 // pred_check_branch
          %209 = sbr.rel (%p207) target = $region28
        $region27: #{tpu_custom_call.1} parent=11 // pred_region
          _
        $region28: #{tpu_custom_call.1} parent=11 // pred_fallthru
          _
        // Predicated region
        $region29: #{tpu_custom_call.1} parent=11 // pred_check
          %p210 = pneg %p147
        $region30: #{tpu_custom_call.1} parent=11 // pred_check_branch
          %212 = sbr.rel (%p210) target = $region32
        $region31: #{tpu_custom_call.1} parent=11 // pred_region
          _
        $region32: #{tpu_custom_call.1} parent=11 // pred_fallthru
          _
      $region12: #{tpu_custom_call.1} parent=5 // pred_fallthru
        _
      %p213 = scmp.lt.s32.totalorder %s16, 2
      // Predicated region
      $region33: #{tpu_custom_call.1} parent=5 // pred_check
        %p214 = pneg %p213
      $region34: #{tpu_custom_call.1} parent=5 // pred_check_branch
        %216 = sbr.rel (%p214) target = $region36
      $region35: #{tpu_custom_call.1} parent=5 // pred_region
        // Predicated region
        $region37: #{tpu_custom_call.1} parent=35 // pred_check
          %p217 = pneg %p36
        $region38: #{tpu_custom_call.1} parent=35 // pred_check_branch
          %219 = sbr.rel (%p217) target = $region40
        $region39: #{tpu_custom_call.1} parent=35 // pred_region
          %s220 = smul.u32 4, %s16
          %p221 = scmp.lt.s32.totalorder %s220, 7
          %s222 = scalar_select %p221, %s220, 7
          %s223 = smul.addr %s222, 8
          %s224 = scalar_lea.vmem %s0, %s223
          %s225 = smul.u32 4, %s16
        $region40: #{tpu_custom_call.1} parent=35 // pred_fallthru
          _
      $region36: #{tpu_custom_call.1} parent=5 // pred_fallthru
        _
      %p226 = scmp.le.s32.totalorder 1, %s16
      %p227 = scmp.lt.s32.totalorder %s16, 3
      %p228 = pnand %p226, %p227
      %p229 = pneg %p228
      // Predicated region
      $region41: #{tpu_custom_call.1} parent=5 // pred_check
        _
      $region42: #{tpu_custom_call.1} parent=5 // pred_check_branch
        %231 = sbr.rel (%p228) target = $region44
      $region43: #{tpu_custom_call.1} parent=5 // pred_region
        %s232 = ssub.s32 %s16, 1
        // Predicated region
        $region45: #{tpu_custom_call.1} parent=43 // pred_check
          %p233 = pneg %p105
        $region46: #{tpu_custom_call.1} parent=43 // pred_check_branch
          %235 = sbr.rel (%p233) target = $region48
        $region47: #{tpu_custom_call.1} parent=43 // pred_region
          %236 = dma.done [#allocation5], 6144
        $region48: #{tpu_custom_call.1} parent=43 // pred_fallthru
          _
        %s237 = smul.u32 4, %s21
        %p238 = scmp.lt.s32.totalorder %s237, 7
        %s239 = scalar_select %p238, %s237, 7
        %s240 = smul.addr %s239, 8
        %s241 = scalar_lea.vmem %s0, %s240
        %p242 = pneg %p42
        %p243 = pneg %p39
        %p244 = pneg %p63
        %p245 = pneg %p60
        %p246 = pneg %p84
        %p247 = pneg %p81
        %p248 = pneg %p105
        %p249 = pneg %p102
        %p250 = pneg %p126
        %p251 = pneg %p123
        %p252 = pneg %p147
        %p253 = pneg %p144
        %p254 = pneg %p173
        %p255 = pneg %p170
        %s256 = sand.u32 %s160, 1
        %s257 = scalar_lea.sflag [#allocation6], %s256
        %s258 = sand.u32 %s160, 1
        %s259 = smul.addr %s258, 32
        %s260 = scalar_lea.vmem [#allocation7], %s259
        %s261 = smul.u32 4, %s21
        %p262 = scmp.lt.s32.totalorder %s261, 7
        %s263 = scalar_select %p262, %s261, 7
        %s264 = smul.addr %s263, 8
        %s265 = scalar_lea.vmem %s0, %s264
        %s266 = smul.u32 4, %s21
        %s267 = smul.u32 4, %s21
        %p268 = scmp.eq.s32.totalorder %s21, 0
        // Predicated region
        $region49: #{tpu_custom_call.1} parent=43 // pred_check
          %p269 = pneg %p268
        $region50: #{tpu_custom_call.1} parent=43 // pred_check_branch
          %271 = sbr.rel (%p269) target = $region52
        $region51: #{tpu_custom_call.1} parent=43 // pred_region
          %v272 = vld [vmem:[%s1] sm:$0xff]
          %273 = vst [vmem:[#allocation2] sm:$0xff] %v272
        $region52: #{tpu_custom_call.1} parent=43 // pred_fallthru
          _
        %v274 = vld [vmem:[%s265] sm:$0xff]
        %v275 = vld [vmem:[%s265 + $0x8] sm:$0xff]
        %v276 = vld [vmem:[%s265 + $0x10] sm:$0xff]
        %v277 = vld [vmem:[%s265 + $0x18] sm:$0xff]
        %v278 = vld [vmem:[%s2] sm:$0xff]
        %v279 = vld [vmem:[%s2 + $0x8] sm:$0xff]
        %v280 = vld [vmem:[%s2 + $0x10] sm:$0xff]
        %v281 = vld [vmem:[%s2 + $0x18] sm:$0xff]
        %v282 = vld [vmem:[%s2 + $0x20] sm:$0xff]
        %v283 = vld [vmem:[%s2 + $0x28] sm:$0xff]
        %v284 = vld [vmem:[%s4] sm:$0x7]
        %v286 = vlaneseq
        %v287 = vshrl.u32 %v286, 7
        %v288 = vsub.s32 0, %v287
        %v289 = vrot.slane %v284, %v288
        %v290 = vlaneseq
        %v291 = vshrl.u32 %v290, 7
        %v292 = vsub.s32 1, %v291
        %v293 = vrot.slane %v284, %v292
        %v294 = vlaneseq
        %v295 = vshrl.u32 %v294, 7
        %v296 = vsub.s32 2, %v295
        %v297 = vrot.slane %v284, %v296
        %vm301 = vcmask 130048
        %v303 = vsel %vm301, %v274, 0
        %v306 = vsel %vm301, %v275, 0
        %v309 = vsel %vm301, %v276, 0
        %v312 = vsel %vm301, %v277, 0
        %314 = vmatprep.subr.mxu0 %v279
        %315 = vmatpush1.msra.mxu0 %v278
        %316 = vmatprep.subr.mxu0 %v282
        %317 = vmatpush1.msra.mxu0 %v281
        %318 = vmatprep.subr.mxu0 0.0
        %319 = vmatpush1.msra.mxu0 0.0
        %320 = vmatprep.subr.mxu0 0.0
        %321 = vmatpush1.msra.mxu0 0.0
        %322 = vmatprep.subr.mxu0 0.0
        %323 = vmatpush1.msra.mxu0 0.0
        %324 = vmatprep.subr.mxu0 0.0
        %325 = vmatpush1.msra.mxu0 0.0
        %326 = vmatprep.subr.mxu0 0.0
        %327 = vmatpush1.msra.mxu0 0.0
        %328 = vmatprep.subr.mxu0 0.0
        %329 = vmatpush1.msra.mxu0 0.0
        %330 = vmatprep.subr.mxu0 0.0
        %331 = vmatpush1.msra.mxu0 0.0
        %332 = vmatprep.subr.mxu0 0.0
        %333 = vmatpush1.msra.mxu0 0.0
        %334 = vmatprep.subr.mxu0 0.0
        %335 = vmatpush1.msra.mxu0 0.0
        %336 = vmatprep.subr.mxu0 0.0
        %337 = vmatpush1.msra.mxu0 0.0
        %338 = vmatprep.subr.mxu0 0.0
        %339 = vmatpush1.msra.mxu0 0.0
        %340 = vmatprep.subr.mxu0 0.0
        %341 = vmatpush1.msra.mxu0 0.0
        %342 = vmatprep.subr.mxu0 0.0
        %343 = vmatpush1.msra.mxu0 0.0
        %344 = vmatprep.subr.mxu0 0.0
        %345 = vmatpush1.msra.mxu0 0.0
        %346 = vmatprep.subr.mxu0 0.0
        %347 = vmatpush1.msra.mxu0 0.0
        %348 = vmatprep.subr.mxu0 0.0
        %349 = vmatpush1.msra.mxu0 0.0
        %350 = vmatprep.subr.mxu0 0.0
        %351 = vmatpush1.msra.mxu0 0.0
        %352 = vmatprep.subr.mxu0 0.0
        %353 = vmatpush1.msra.mxu0 0.0
        %354 = vmatprep.subr.mxu0 0.0
        %355 = vmatpush1.msra.mxu0 0.0
        %356 = vmatprep.subr.mxu0 0.0
        %357 = vmatpush1.msra.mxu0 0.0
        %358 = vmatprep.subr.mxu0 0.0
        %359 = vmatpush1.msra.mxu0 0.0
        %360 = vmatprep.subr.mxu0 0.0
        %361 = vmatpush1.msra.mxu0 0.0
        %362 = vmatprep.subr.mxu0 0.0
        %363 = vmatpush1.msra.mxu0 0.0
        %364 = vmatprep.subr.mxu0 0.0
        %365 = vmatpush1.msra.mxu0 0.0
        %366 = vmatprep.subr.mxu0 0.0
        %367 = vmatpush1.msra.mxu0 0.0
        %368 = vmatprep.subr.mxu0 0.0
        %369 = vmatpush1.msra.mxu0 0.0
        %370 = vmatprep.subr.mxu0 0.0
        %371 = vmatpush1.msra.mxu0 0.0
        %372 = vmatprep.subr.mxu0 0.0
        %373 = vmatpush1.msra.mxu0 0.0
        %374 = vmatprep.subr.mxu0 0.0
        %375 = vmatpush1.msra.mxu0 0.0
        %376 = vmatprep.subr.mxu0 0.0
        %377 = vmatpush1.msra.mxu0 0.0
        %378 = vmatprep.mubr.f32.mxu0 0.0
        %379 = vmatmul.mubr.f32.gmra.mrb[0].mxu0 %v303
        %v380 = vpop.f32.mrb[0].mxu0
        %v381 = vadd.f32 %v289, %v380
        %v382 = vpop.f32.mrb[0].mxu0
        %v383 = vadd.f32 %v293, %v382
        %384 = vmatprep.mubr.f32.mxu0 0.0
        %385 = vmatmul.mubr.f32.gmra.mrb[0].mxu0 %v306
        %v386 = vpop.f32.mrb[0].mxu0
        %v387 = vadd.f32 %v289, %v386
        %v388 = vpop.f32.mrb[0].mxu0
        %v389 = vadd.f32 %v293, %v388
        %390 = vmatprep.mubr.f32.mxu0 0.0
        %391 = vmatmul.mubr.f32.gmra.mrb[0].mxu0 %v309
        %v392 = vpop.f32.mrb[0].mxu0
        %v393 = vadd.f32 %v289, %v392
        %v394 = vpop.f32.mrb[0].mxu0
        %v395 = vadd.f32 %v293, %v394
        %396 = vmatprep.mubr.f32.mxu0 0.0
        %397 = vmatmul.mubr.f32.gmra.mrb[0].mxu0 %v312
        %v398 = vpop.f32.mrb[0].mxu0
        %v399 = vadd.f32 %v289, %v398
        %v400 = vpop.f32.mrb[0].mxu0
        %v401 = vadd.f32 %v293, %v400
        %402 = vdwg.mxu0
        %403 = vmatprep.subr.mxu0 0.0
        %404 = vmatpush1.msra.mxu0 %v280
        %405 = vmatprep.subr.mxu0 0.0
        %406 = vmatpush1.msra.mxu0 %v283
        %407 = vmatprep.subr.mxu0 0.0
        %408 = vmatpush1.msra.mxu0 0.0
        %409 = vmatprep.subr.mxu0 0.0
        %410 = vmatpush1.msra.mxu0 0.0
        %411 = vmatprep.subr.mxu0 0.0
        %412 = vmatpush1.msra.mxu0 0.0
        %413 = vmatprep.subr.mxu0 0.0
        %414 = vmatpush1.msra.mxu0 0.0
        %415 = vmatprep.subr.mxu0 0.0
        %416 = vmatpush1.msra.mxu0 0.0
        %417 = vmatprep.subr.mxu0 0.0
        %418 = vmatpush1.msra.mxu0 0.0
        %419 = vmatprep.subr.mxu0 0.0
        %420 = vmatpush1.msra.mxu0 0.0
        %421 = vmatprep.subr.mxu0 0.0
        %422 = vmatpush1.msra.mxu0 0.0
        %423 = vmatprep.subr.mxu0 0.0
        %424 = vmatpush1.msra.mxu0 0.0
        %425 = vmatprep.subr.mxu0 0.0
        %426 = vmatpush1.msra.mxu0 0.0
        %427 = vmatprep.subr.mxu0 0.0
        %428 = vmatpush1.msra.mxu0 0.0
        %429 = vmatprep.subr.mxu0 0.0
        %430 = vmatpush1.msra.mxu0 0.0
        %431 = vmatprep.subr.mxu0 0.0
        %432 = vmatpush1.msra.mxu0 0.0
        %433 = vmatprep.subr.mxu0 0.0
        %434 = vmatpush1.msra.mxu0 0.0
        %435 = vmatprep.subr.mxu0 0.0
        %436 = vmatpush1.msra.mxu0 0.0
        %437 = vmatprep.subr.mxu0 0.0
        %438 = vmatpush1.msra.mxu0 0.0
        %439 = vmatprep.subr.mxu0 0.0
        %440 = vmatpush1.msra.mxu0 0.0
        %441 = vmatprep.subr.mxu0 0.0
        %442 = vmatpush1.msra.mxu0 0.0
        %443 = vmatprep.subr.mxu0 0.0
        %444 = vmatpush1.msra.mxu0 0.0
        %445 = vmatprep.subr.mxu0 0.0
        %446 = vmatpush1.msra.mxu0 0.0
        %447 = vmatprep.subr.mxu0 0.0
        %448 = vmatpush1.msra.mxu0 0.0
        %449 = vmatprep.subr.mxu0 0.0
        %450 = vmatpush1.msra.mxu0 0.0
        %451 = vmatprep.subr.mxu0 0.0
        %452 = vmatpush1.msra.mxu0 0.0
        %453 = vmatprep.subr.mxu0 0.0
        %454 = vmatpush1.msra.mxu0 0.0
        %455 = vmatprep.subr.mxu0 0.0
        %456 = vmatpush1.msra.mxu0 0.0
        %457 = vmatprep.subr.mxu0 0.0
        %458 = vmatpush1.msra.mxu0 0.0
        %459 = vmatprep.subr.mxu0 0.0
        %460 = vmatpush1.msra.mxu0 0.0
        %461 = vmatprep.subr.mxu0 0.0
        %462 = vmatpush1.msra.mxu0 0.0
        %463 = vmatprep.subr.mxu0 0.0
        %464 = vmatpush1.msra.mxu0 0.0
        %465 = vmatprep.subr.mxu0 0.0
        %466 = vmatpush1.msra.mxu0 0.0
        %467 = vmatprep.mubr.f32.mxu0 0.0
        %468 = vmatmul.mubr.f32.gmra.mrb[0].mxu0 %v303
        %v469 = vpop.f32.mrb[0].mxu0
        %v470 = vadd.f32 %v297, %v469
        %v471 = vpop.f32.mrb[0].mxu0
        %472 = vmatprep.mubr.f32.mxu0 0.0
        %473 = vmatmul.mubr.f32.gmra.mrb[0].mxu0 %v306
        %v474 = vpop.f32.mrb[0].mxu0
        %v475 = vadd.f32 %v297, %v474
        %v476 = vpop.f32.mrb[0].mxu0
        %477 = vmatprep.mubr.f32.mxu0 0.0
        %478 = vmatmul.mubr.f32.gmra.mrb[0].mxu0 %v309
        %v479 = vpop.f32.mrb[0].mxu0
        %v480 = vadd.f32 %v297, %v479
        %v481 = vpop.f32.mrb[0].mxu0
        %482 = vmatprep.mubr.f32.mxu0 0.0
        %483 = vmatmul.mubr.f32.gmra.mrb[0].mxu0 %v312
        %v484 = vpop.f32.mrb[0].mxu0
        %v485 = vadd.f32 %v297, %v484
        %v486 = vpop.f32.mrb[0].mxu0
        %487 = vdwg.mxu0
        %488 = vst [vmem:[#allocation3] sm:$0xff] %v381
        %489 = vst [vmem:[#allocation3 + $0x8] sm:$0xff] %v383
        %490 = vst [vmem:[#allocation3 + $0x10] sm:$0xff] %v470
        %491 = vst [vmem:[#allocation3 + $0x18] sm:$0xff] %v387
        %492 = vst [vmem:[#allocation3 + $0x20] sm:$0xff] %v389
        %493 = vst [vmem:[#allocation3 + $0x28] sm:$0xff] %v475
        %494 = vst [vmem:[#allocation3 + $0x30] sm:$0xff] %v393
        %495 = vst [vmem:[#allocation3 + $0x38] sm:$0xff] %v395
        %496 = vst [vmem:[#allocation3 + $0x40] sm:$0xff] %v480
        %497 = vst [vmem:[#allocation3 + $0x48] sm:$0xff] %v399
        %498 = vst [vmem:[#allocation3 + $0x50] sm:$0xff] %v401
        %499 = vst [vmem:[#allocation3 + $0x58] sm:$0xff] %v485
        %v500 = vld [vmem:[#allocation4] sm:$0xff]
        %v501 = vld [vmem:[#allocation4 + $0x8] sm:$0xff]
        %v502 = vld [vmem:[#allocation4 + $0x10] sm:$0xff]
        %v503 = vld [vmem:[#allocation4 + $0x18] sm:$0xff]
        %v504 = vld [vmem:[#allocation4 + $0x20] sm:$0xff]
        %v505 = vld [vmem:[#allocation4 + $0x28] sm:$0xff]
        %v506 = vld [vmem:[#allocation4 + $0x30] sm:$0xff]
        %v507 = vld [vmem:[#allocation4 + $0x38] sm:$0xff]
        %v508 = vld [vmem:[#allocation4 + $0x40] sm:$0xff]
        %v509 = vld [vmem:[#allocation4 + $0x48] sm:$0xff]
        %v510 = vld [vmem:[#allocation4 + $0x50] sm:$0xff]
        %v511 = vld [vmem:[#allocation4 + $0x58] sm:$0xff]
        %v512 = vld [vmem:[#allocation4 + $0x60] sm:$0xff]
        %v513 = vld [vmem:[#allocation4 + $0x68] sm:$0xff]
        %v514 = vld [vmem:[#allocation4 + $0x70] sm:$0xff]
        %v515 = vld [vmem:[#allocation4 + $0x78] sm:$0xff]
        %v516 = vld [vmem:[#allocation4 + $0x80] sm:$0xff]
        %v517 = vld [vmem:[#allocation4 + $0x88] sm:$0xff]
        %v518 = vld [vmem:[#allocation4 + $0x90] sm:$0xff]
        %v519 = vld [vmem:[#allocation4 + $0x98] sm:$0xff]
        %v520 = vld [vmem:[#allocation4 + $0xa0] sm:$0xff]
        %v521 = vld [vmem:[#allocation4 + $0xa8] sm:$0xff]
        %v522 = vld [vmem:[#allocation4 + $0xb0] sm:$0xff]
        %v523 = vld [vmem:[#allocation4 + $0xb8] sm:$0xff]
        %v524 = vld [vmem:[#allocation4 + $0xc0] sm:$0xff]
        %v525 = vld [vmem:[#allocation4 + $0xc8] sm:$0xff]
        %v526 = vld [vmem:[#allocation4 + $0xd0] sm:$0xff]
        %v527 = vld [vmem:[#allocation4 + $0xd8] sm:$0xff]
        %v528 = vld [vmem:[#allocation4 + $0xe0] sm:$0xff]
        %v529 = vld [vmem:[#allocation4 + $0xe8] sm:$0xff]
        %v530 = vld [vmem:[#allocation4 + $0xf0] sm:$0xff]
        %v531 = vld [vmem:[#allocation4 + $0xf8] sm:$0xff]
        %v532 = vld [vmem:[#allocation4 + $0x100] sm:$0xff]
        %v533 = vld [vmem:[#allocation4 + $0x108] sm:$0xff]
        %v534 = vld [vmem:[#allocation4 + $0x110] sm:$0xff]
        %v535 = vld [vmem:[#allocation4 + $0x118] sm:$0xff]
        %v536 = vld [vmem:[#allocation4 + $0x120] sm:$0xff]
        %v537 = vld [vmem:[#allocation4 + $0x128] sm:$0xff]
        %v538 = vld [vmem:[#allocation4 + $0x130] sm:$0xff]
        %v539 = vld [vmem:[#allocation4 + $0x138] sm:$0xff]
        %v540 = vld [vmem:[#allocation4 + $0x140] sm:$0xff]
        %v541 = vld [vmem:[#allocation4 + $0x148] sm:$0xff]
        %v542 = vld [vmem:[#allocation4 + $0x150] sm:$0xff]
        %v543 = vld [vmem:[#allocation4 + $0x158] sm:$0xff]
        %v544 = vld [vmem:[#allocation4 + $0x160] sm:$0xff]
        %v545 = vld [vmem:[#allocation4 + $0x168] sm:$0xff]
        %v546 = vld [vmem:[#allocation4 + $0x170] sm:$0xff]
        %v547 = vld [vmem:[#allocation4 + $0x178] sm:$0xff]
        %v548 = vld [vmem:[%s5] sm:$0x1]
        %v550 = vlaneseq
        %v551 = vshrl.u32 %v550, 7
        %v552 = vsub.s32 0, %v551
        %v553 = vrot.slane %v548, %v552
        %v555 = vld [vmem:[#allocation2] sm:$0xff]
        %s556 = smul.u32 0, 3
        %s557 = smul.addr %s556, 8
        %s558 = scalar_lea.vmem [#allocation3], %s557
        %v559 = vld [vmem:[%s558] sm:$0xff]
        %v560 = vld [vmem:[%s558 + $0x8] sm:$0xff]
        %v561 = vld [vmem:[%s558 + $0x10] sm:$0xff]
        %562 = vmatprep.subr.mxu0 %v501
        %563 = vmatpush1.msra.mxu0 %v500
        %564 = vmatprep.subr.mxu0 %v504
        %565 = vmatpush1.msra.mxu0 %v503
        %566 = vmatprep.subr.mxu0 %v507
        %567 = vmatpush1.msra.mxu0 %v506
        %568 = vmatprep.subr.mxu0 %v510
        %569 = vmatpush1.msra.mxu0 %v509
        %570 = vmatprep.subr.mxu0 %v513
        %571 = vmatpush1.msra.mxu0 %v512
        %572 = vmatprep.subr.mxu0 %v516
        %573 = vmatpush1.msra.mxu0 %v515
        %574 = vmatprep.subr.mxu0 %v519
        %575 = vmatpush1.msra.mxu0 %v518
        %576 = vmatprep.subr.mxu0 %v522
        %577 = vmatpush1.msra.mxu0 %v521
        %578 = vmatprep.subr.mxu0 %v525
        %579 = vmatpush1.msra.mxu0 %v524
        %580 = vmatprep.subr.mxu0 %v528
        %581 = vmatpush1.msra.mxu0 %v527
        %582 = vmatprep.subr.mxu0 %v531
        %583 = vmatpush1.msra.mxu0 %v530
        %584 = vmatprep.subr.mxu0 %v534
        %585 = vmatpush1.msra.mxu0 %v533
        %586 = vmatprep.subr.mxu0 %v537
        %587 = vmatpush1.msra.mxu0 %v536
        %588 = vmatprep.subr.mxu0 %v540
        %589 = vmatpush1.msra.mxu0 %v539
        %590 = vmatprep.subr.mxu0 %v543
        %591 = vmatpush1.msra.mxu0 %v542
        %592 = vmatprep.subr.mxu0 %v546
        %593 = vmatpush1.msra.mxu0 %v545
        %594 = vmatprep.subr.mxu0 0.0
        %595 = vmatpush1.msra.mxu0 0.0
        %596 = vmatprep.subr.mxu0 0.0
        %597 = vmatpush1.msra.mxu0 0.0
        %598 = vmatprep.subr.mxu0 0.0
        %599 = vmatpush1.msra.mxu0 0.0
        %600 = vmatprep.subr.mxu0 0.0
        %601 = vmatpush1.msra.mxu0 0.0
        %602 = vmatprep.subr.mxu0 0.0
        %603 = vmatpush1.msra.mxu0 0.0
        %604 = vmatprep.subr.mxu0 0.0
        %605 = vmatpush1.msra.mxu0 0.0
        %606 = vmatprep.subr.mxu0 0.0
        %607 = vmatpush1.msra.mxu0 0.0
        %608 = vmatprep.subr.mxu0 0.0
        %609 = vmatpush1.msra.mxu0 0.0
        %610 = vmatprep.subr.mxu0 0.0
        %611 = vmatpush1.msra.mxu0 0.0
        %612 = vmatprep.subr.mxu0 0.0
        %613 = vmatpush1.msra.mxu0 0.0
        %614 = vmatprep.subr.mxu0 0.0
        %615 = vmatpush1.msra.mxu0 0.0
        %616 = vmatprep.subr.mxu0 0.0
        %617 = vmatpush1.msra.mxu0 0.0
        %618 = vmatprep.subr.mxu0 0.0
        %619 = vmatpush1.msra.mxu0 0.0
        %620 = vmatprep.subr.mxu0 0.0
        %621 = vmatpush1.msra.mxu0 0.0
        %622 = vmatprep.subr.mxu0 0.0
        %623 = vmatpush1.msra.mxu0 0.0
        %624 = vmatprep.subr.mxu0 0.0
        %625 = vmatpush1.msra.mxu0 0.0
        %626 = vmatprep.mubr.f32.mxu0 0.0
        %627 = vmatmul.mubr.f32.gmra.mrb[0].mxu0 %v555
        %v628 = vpop.f32.mrb[0].mxu0
        %v629 = vadd.f32 0.0, %v628
        %v630 = vpop.f32.mrb[0].mxu0
        %v631 = vadd.f32 0.0, %v630
        %632 = vdwg.mxu0
        %633 = vmatprep.subr.mxu0 0.0
        %634 = vmatpush1.msra.mxu0 %v502
        %635 = vmatprep.subr.mxu0 0.0
        %636 = vmatpush1.msra.mxu0 %v505
        %637 = vmatprep.subr.mxu0 0.0
        %638 = vmatpush1.msra.mxu0 %v508
        %639 = vmatprep.subr.mxu0 0.0
        %640 = vmatpush1.msra.mxu0 %v511
        %641 = vmatprep.subr.mxu0 0.0
        %642 = vmatpush1.msra.mxu0 %v514
        %643 = vmatprep.subr.mxu0 0.0
        %644 = vmatpush1.msra.mxu0 %v517
        %645 = vmatprep.subr.mxu0 0.0
        %646 = vmatpush1.msra.mxu0 %v520
        %647 = vmatprep.subr.mxu0 0.0
        %648 = vmatpush1.msra.mxu0 %v523
        %649 = vmatprep.subr.mxu0 0.0
        %650 = vmatpush1.msra.mxu0 %v526
        %651 = vmatprep.subr.mxu0 0.0
        %652 = vmatpush1.msra.mxu0 %v529
        %653 = vmatprep.subr.mxu0 0.0
        %654 = vmatpush1.msra.mxu0 %v532
        %655 = vmatprep.subr.mxu0 0.0
        %656 = vmatpush1.msra.mxu0 %v535
        %657 = vmatprep.subr.mxu0 0.0
        %658 = vmatpush1.msra.mxu0 %v538
        %659 = vmatprep.subr.mxu0 0.0
        %660 = vmatpush1.msra.mxu0 %v541
        %661 = vmatprep.subr.mxu0 0.0
        %662 = vmatpush1.msra.mxu0 %v544
        %663 = vmatprep.subr.mxu0 0.0
        %664 = vmatpush1.msra.mxu0 %v547
        %665 = vmatprep.subr.mxu0 0.0
        %666 = vmatpush1.msra.mxu0 0.0
        %667 = vmatprep.subr.mxu0 0.0
        %668 = vmatpush1.msra.mxu0 0.0
        %669 = vmatprep.subr.mxu0 0.0
        %670 = vmatpush1.msra.mxu0 0.0
        %671 = vmatprep.subr.mxu0 0.0
        %672 = vmatpush1.msra.mxu0 0.0
        %673 = vmatprep.subr.mxu0 0.0
        %674 = vmatpush1.msra.mxu0 0.0
        %675 = vmatprep.subr.mxu0 0.0
        %676 = vmatpush1.msra.mxu0 0.0
        %677 = vmatprep.subr.mxu0 0.0
        %678 = vmatpush1.msra.mxu0 0.0
        %679 = vmatprep.subr.mxu0 0.0
        %680 = vmatpush1.msra.mxu0 0.0
        %681 = vmatprep.subr.mxu0 0.0
        %682 = vmatpush1.msra.mxu0 0.0
        %683 = vmatprep.subr.mxu0 0.0
        %684 = vmatpush1.msra.mxu0 0.0
        %685 = vmatprep.subr.mxu0 0.0
        %686 = vmatpush1.msra.mxu0 0.0
        %687 = vmatprep.subr.mxu0 0.0
        %688 = vmatpush1.msra.mxu0 0.0
        %689 = vmatprep.subr.mxu0 0.0
        %690 = vmatpush1.msra.mxu0 0.0
        %691 = vmatprep.subr.mxu0 0.0
        %692 = vmatpush1.msra.mxu0 0.0
        %693 = vmatprep.subr.mxu0 0.0
        %694 = vmatpush1.msra.mxu0 0.0
        %695 = vmatprep.subr.mxu0 0.0
        %696 = vmatpush1.msra.mxu0 0.0
        %697 = vmatprep.mubr.f32.mxu0 0.0
        %698 = vmatmul.mubr.f32.gmra.mrb[0].mxu0 %v555
        %v699 = vpop.f32.mrb[0].mxu0
        %v700 = vadd.f32 0.0, %v699
        %v701 = vpop.f32.mrb[0].mxu0
        %702 = vdwg.mxu0
        %v703 = vadd.f32 %v559, %v629
        %v704 = vxor.u32 %v703, 2147483648
        %v705 = vmul.f32 %v704, 1.442695
        %v706 = vpow.pop %v705
        %v707 = vadd.f32 %v706, 1.0
        %v708 = vrcp.pop %v707
        %v709 = vmul.f32 1.0, %v708
        %v710 = vadd.f32 %v560, %v631
        %v711 = vxor.u32 %v710, 2147483648
        %v712 = vmul.f32 %v711, 1.442695
        %v713 = vpow.pop %v712
        %v714 = vadd.f32 %v713, 1.0
        %v715 = vrcp.pop %v714
        %v716 = vmul.f32 1.0, %v715
        %v717 = vadd.f32 %v700, %v553
        %v718 = vmul.f32 %v709, %v717
        %v719 = vadd.f32 %v561, %v718
        %v720 = vtanh.pop %v719
        %v721 = vsub.f32 %v555, %v720
        %v722 = vmul.f32 %v716, %v721
        %v723 = vadd.f32 %v720, %v722
        %724 = vst [vmem:[%s260] sm:$0xff] %v723
        %s725 = smul.u32 1, 3
        %s726 = smul.addr %s725, 8
        %s727 = scalar_lea.vmem [#allocation3], %s726
        %v728 = vld [vmem:[%s727] sm:$0xff]
        %v729 = vld [vmem:[%s727 + $0x8] sm:$0xff]
        %v730 = vld [vmem:[%s727 + $0x10] sm:$0xff]
        %731 = vmatprep.subr.mxu0 %v501
        %732 = vmatpush1.msra.mxu0 %v500
        %733 = vmatprep.subr.mxu0 %v504
        %734 = vmatpush1.msra.mxu0 %v503
        %735 = vmatprep.subr.mxu0 %v507
        %736 = vmatpush1.msra.mxu0 %v506
        %737 = vmatprep.subr.mxu0 %v510
        %738 = vmatpush1.msra.mxu0 %v509
        %739 = vmatprep.subr.mxu0 %v513
        %740 = vmatpush1.msra.mxu0 %v512
        %741 = vmatprep.subr.mxu0 %v516
        %742 = vmatpush1.msra.mxu0 %v515
        %743 = vmatprep.subr.mxu0 %v519
        %744 = vmatpush1.msra.mxu0 %v518
        %745 = vmatprep.subr.mxu0 %v522
        %746 = vmatpush1.msra.mxu0 %v521
        %747 = vmatprep.subr.mxu0 %v525
        %748 = vmatpush1.msra.mxu0 %v524
        %749 = vmatprep.subr.mxu0 %v528
        %750 = vmatpush1.msra.mxu0 %v527
        %751 = vmatprep.subr.mxu0 %v531
        %752 = vmatpush1.msra.mxu0 %v530
        %753 = vmatprep.subr.mxu0 %v534
        %754 = vmatpush1.msra.mxu0 %v533
        %755 = vmatprep.subr.mxu0 %v537
        %756 = vmatpush1.msra.mxu0 %v536
        %757 = vmatprep.subr.mxu0 %v540
        %758 = vmatpush1.msra.mxu0 %v539
        %759 = vmatprep.subr.mxu0 %v543
        %760 = vmatpush1.msra.mxu0 %v542
        %761 = vmatprep.subr.mxu0 %v546
        %762 = vmatpush1.msra.mxu0 %v545
        %763 = vmatprep.subr.mxu0 0.0
        %764 = vmatpush1.msra.mxu0 0.0
        %765 = vmatprep.subr.mxu0 0.0
        %766 = vmatpush1.msra.mxu0 0.0
        %767 = vmatprep.subr.mxu0 0.0
        %768 = vmatpush1.msra.mxu0 0.0
        %769 = vmatprep.subr.mxu0 0.0
        %770 = vmatpush1.msra.mxu0 0.0
        %771 = vmatprep.subr.mxu0 0.0
        %772 = vmatpush1.msra.mxu0 0.0
        %773 = vmatprep.subr.mxu0 0.0
        %774 = vmatpush1.msra.mxu0 0.0
        %775 = vmatprep.subr.mxu0 0.0
        %776 = vmatpush1.msra.mxu0 0.0
        %777 = vmatprep.subr.mxu0 0.0
        %778 = vmatpush1.msra.mxu0 0.0
        %779 = vmatprep.subr.mxu0 0.0
        %780 = vmatpush1.msra.mxu0 0.0
        %781 = vmatprep.subr.mxu0 0.0
        %782 = vmatpush1.msra.mxu0 0.0
        %783 = vmatprep.subr.mxu0 0.0
        %784 = vmatpush1.msra.mxu0 0.0
        %785 = vmatprep.subr.mxu0 0.0
        %786 = vmatpush1.msra.mxu0 0.0
        %787 = vmatprep.subr.mxu0 0.0
        %788 = vmatpush1.msra.mxu0 0.0
        %789 = vmatprep.subr.mxu0 0.0
        %790 = vmatpush1.msra.mxu0 0.0
        %791 = vmatprep.subr.mxu0 0.0
        %792 = vmatpush1.msra.mxu0 0.0
        %793 = vmatprep.subr.mxu0 0.0
        %794 = vmatpush1.msra.mxu0 0.0
        %795 = vmatprep.mubr.f32.mxu0 0.0
        %796 = vmatmul.mubr.f32.gmra.mrb[0].mxu0 %v723
        %v797 = vpop.f32.mrb[0].mxu0
        %v798 = vadd.f32 0.0, %v797
        %v799 = vpop.f32.mrb[0].mxu0
        %v800 = vadd.f32 0.0, %v799
        %801 = vdwg.mxu0
        %802 = vmatprep.subr.mxu0 0.0
        %803 = vmatpush1.msra.mxu0 %v502
        %804 = vmatprep.subr.mxu0 0.0
        %805 = vmatpush1.msra.mxu0 %v505
        %806 = vmatprep.subr.mxu0 0.0
        %807 = vmatpush1.msra.mxu0 %v508
        %808 = vmatprep.subr.mxu0 0.0
        %809 = vmatpush1.msra.mxu0 %v511
        %810 = vmatprep.subr.mxu0 0.0
        %811 = vmatpush1.msra.mxu0 %v514
        %812 = vmatprep.subr.mxu0 0.0
        %813 = vmatpush1.msra.mxu0 %v517
        %814 = vmatprep.subr.mxu0 0.0
        %815 = vmatpush1.msra.mxu0 %v520
        %816 = vmatprep.subr.mxu0 0.0
        %817 = vmatpush1.msra.mxu0 %v523
        %818 = vmatprep.subr.mxu0 0.0
        %819 = vmatpush1.msra.mxu0 %v526
        %820 = vmatprep.subr.mxu0 0.0
        %821 = vmatpush1.msra.mxu0 %v529
        %822 = vmatprep.subr.mxu0 0.0
        %823 = vmatpush1.msra.mxu0 %v532
        %824 = vmatprep.subr.mxu0 0.0
        %825 = vmatpush1.msra.mxu0 %v535
        %826 = vmatprep.subr.mxu0 0.0
        %827 = vmatpush1.msra.mxu0 %v538
        %828 = vmatprep.subr.mxu0 0.0
        %829 = vmatpush1.msra.mxu0 %v541
        %830 = vmatprep.subr.mxu0 0.0
        %831 = vmatpush1.msra.mxu0 %v544
        %832 = vmatprep.subr.mxu0 0.0
        %833 = vmatpush1.msra.mxu0 %v547
        %834 = vmatprep.subr.mxu0 0.0
        %835 = vmatpush1.msra.mxu0 0.0
        %836 = vmatprep.subr.mxu0 0.0
        %837 = vmatpush1.msra.mxu0 0.0
        %838 = vmatprep.subr.mxu0 0.0
        %839 = vmatpush1.msra.mxu0 0.0
        %840 = vmatprep.subr.mxu0 0.0
        %841 = vmatpush1.msra.mxu0 0.0
        %842 = vmatprep.subr.mxu0 0.0
        %843 = vmatpush1.msra.mxu0 0.0
        %844 = vmatprep.subr.mxu0 0.0
        %845 = vmatpush1.msra.mxu0 0.0
        %846 = vmatprep.subr.mxu0 0.0
        %847 = vmatpush1.msra.mxu0 0.0
        %848 = vmatprep.subr.mxu0 0.0
        %849 = vmatpush1.msra.mxu0 0.0
        %850 = vmatprep.subr.mxu0 0.0
        %851 = vmatpush1.msra.mxu0 0.0
        %852 = vmatprep.subr.mxu0 0.0
        %853 = vmatpush1.msra.mxu0 0.0
        %854 = vmatprep.subr.mxu0 0.0
        %855 = vmatpush1.msra.mxu0 0.0
        %856 = vmatprep.subr.mxu0 0.0
        %857 = vmatpush1.msra.mxu0 0.0
        %858 = vmatprep.subr.mxu0 0.0
        %859 = vmatpush1.msra.mxu0 0.0
        %860 = vmatprep.subr.mxu0 0.0
        %861 = vmatpush1.msra.mxu0 0.0
        %862 = vmatprep.subr.mxu0 0.0
        %863 = vmatpush1.msra.mxu0 0.0
        %864 = vmatprep.subr.mxu0 0.0
        %865 = vmatpush1.msra.mxu0 0.0
        %866 = vmatprep.mubr.f32.mxu0 0.0
        %867 = vmatmul.mubr.f32.gmra.mrb[0].mxu0 %v723
        %v868 = vpop.f32.mrb[0].mxu0
        %v869 = vadd.f32 0.0, %v868
        %v870 = vpop.f32.mrb[0].mxu0
        %871 = vdwg.mxu0
        %v872 = vadd.f32 %v728, %v798
        %v873 = vxor.u32 %v872, 2147483648
        %v874 = vmul.f32 %v873, 1.442695
        %v875 = vpow.pop %v874
        %v876 = vadd.f32 %v875, 1.0
        %v877 = vrcp.pop %v876
        %v878 = vmul.f32 1.0, %v877
        %v879 = vadd.f32 %v729, %v800
        %v880 = vxor.u32 %v879, 2147483648
        %v881 = vmul.f32 %v880, 1.442695
        %v882 = vpow.pop %v881
        %v883 = vadd.f32 %v882, 1.0
        %v884 = vrcp.pop %v883
        %v885 = vmul.f32 1.0, %v884
        %v886 = vadd.f32 %v869, %v553
        %v887 = vmul.f32 %v878, %v886
        %v888 = vadd.f32 %v730, %v887
        %v889 = vtanh.pop %v888
        %v890 = vsub.f32 %v723, %v889
        %v891 = vmul.f32 %v885, %v890
        %v892 = vadd.f32 %v889, %v891
        %s893 = scalar_lea.vmem %s260, 8 [#allocation7]
        %894 = vst [vmem:[%s893] sm:$0xff] %v892
        %s895 = smul.u32 2, 3
        %s896 = smul.addr %s895, 8
        %s897 = scalar_lea.vmem [#allocation3], %s896
        %v898 = vld [vmem:[%s897] sm:$0xff]
        %v899 = vld [vmem:[%s897 + $0x8] sm:$0xff]
        %v900 = vld [vmem:[%s897 + $0x10] sm:$0xff]
        %901 = vmatprep.subr.mxu0 %v501
        %902 = vmatpush1.msra.mxu0 %v500
        %903 = vmatprep.subr.mxu0 %v504
        %904 = vmatpush1.msra.mxu0 %v503
        %905 = vmatprep.subr.mxu0 %v507
        %906 = vmatpush1.msra.mxu0 %v506
        %907 = vmatprep.subr.mxu0 %v510
        %908 = vmatpush1.msra.mxu0 %v509
        %909 = vmatprep.subr.mxu0 %v513
        %910 = vmatpush1.msra.mxu0 %v512
        %911 = vmatprep.subr.mxu0 %v516
        %912 = vmatpush1.msra.mxu0 %v515
        %913 = vmatprep.subr.mxu0 %v519
        %914 = vmatpush1.msra.mxu0 %v518
        %915 = vmatprep.subr.mxu0 %v522
        %916 = vmatpush1.msra.mxu0 %v521
        %917 = vmatprep.subr.mxu0 %v525
        %918 = vmatpush1.msra.mxu0 %v524
        %919 = vmatprep.subr.mxu0 %v528
        %920 = vmatpush1.msra.mxu0 %v527
        %921 = vmatprep.subr.mxu0 %v531
        %922 = vmatpush1.msra.mxu0 %v530
        %923 = vmatprep.subr.mxu0 %v534
        %924 = vmatpush1.msra.mxu0 %v533
        %925 = vmatprep.subr.mxu0 %v537
        %926 = vmatpush1.msra.mxu0 %v536
        %927 = vmatprep.subr.mxu0 %v540
        %928 = vmatpush1.msra.mxu0 %v539
        %929 = vmatprep.subr.mxu0 %v543
        %930 = vmatpush1.msra.mxu0 %v542
        %931 = vmatprep.subr.mxu0 %v546
        %932 = vmatpush1.msra.mxu0 %v545
        %933 = vmatprep.subr.mxu0 0.0
        %934 = vmatpush1.msra.mxu0 0.0
        %935 = vmatprep.subr.mxu0 0.0
        %936 = vmatpush1.msra.mxu0 0.0
        %937 = vmatprep.subr.mxu0 0.0
        %938 = vmatpush1.msra.mxu0 0.0
        %939 = vmatprep.subr.mxu0 0.0
        %940 = vmatpush1.msra.mxu0 0.0
        %941 = vmatprep.subr.mxu0 0.0
        %942 = vmatpush1.msra.mxu0 0.0
        %943 = vmatprep.subr.mxu0 0.0
        %944 = vmatpush1.msra.mxu0 0.0
        %945 = vmatprep.subr.mxu0 0.0
        %946 = vmatpush1.msra.mxu0 0.0
        %947 = vmatprep.subr.mxu0 0.0
        %948 = vmatpush1.msra.mxu0 0.0
        %949 = vmatprep.subr.mxu0 0.0
        %950 = vmatpush1.msra.mxu0 0.0
        %951 = vmatprep.subr.mxu0 0.0
        %952 = vmatpush1.msra.mxu0 0.0
        %953 = vmatprep.subr.mxu0 0.0
        %954 = vmatpush1.msra.mxu0 0.0
        %955 = vmatprep.subr.mxu0 0.0
        %956 = vmatpush1.msra.mxu0 0.0
        %957 = vmatprep.subr.mxu0 0.0
        %958 = vmatpush1.msra.mxu0 0.0
        %959 = vmatprep.subr.mxu0 0.0
        %960 = vmatpush1.msra.mxu0 0.0
        %961 = vmatprep.subr.mxu0 0.0
        %962 = vmatpush1.msra.mxu0 0.0
        %963 = vmatprep.subr.mxu0 0.0
        %964 = vmatpush1.msra.mxu0 0.0
        %965 = vmatprep.mubr.f32.mxu0 0.0
        %966 = vmatmul.mubr.f32.gmra.mrb[0].mxu0 %v892
        %v967 = vpop.f32.mrb[0].mxu0
        %v968 = vadd.f32 0.0, %v967
        %v969 = vpop.f32.mrb[0].mxu0
        %v970 = vadd.f32 0.0, %v969
        %971 = vdwg.mxu0
        %972 = vmatprep.subr.mxu0 0.0
        %973 = vmatpush1.msra.mxu0 %v502
        %974 = vmatprep.subr.mxu0 0.0
        %975 = vmatpush1.msra.mxu0 %v505
        %976 = vmatprep.subr.mxu0 0.0
        %977 = vmatpush1.msra.mxu0 %v508
        %978 = vmatprep.subr.mxu0 0.0
        %979 = vmatpush1.msra.mxu0 %v511
        %980 = vmatprep.subr.mxu0 0.0
        %981 = vmatpush1.msra.mxu0 %v514
        %982 = vmatprep.subr.mxu0 0.0
        %983 = vmatpush1.msra.mxu0 %v517
        %984 = vmatprep.subr.mxu0 0.0
        %985 = vmatpush1.msra.mxu0 %v520
        %986 = vmatprep.subr.mxu0 0.0
        %987 = vmatpush1.msra.mxu0 %v523
        %988 = vmatprep.subr.mxu0 0.0
        %989 = vmatpush1.msra.mxu0 %v526
        %990 = vmatprep.subr.mxu0 0.0
        %991 = vmatpush1.msra.mxu0 %v529
        %992 = vmatprep.subr.mxu0 0.0
        %993 = vmatpush1.msra.mxu0 %v532
        %994 = vmatprep.subr.mxu0 0.0
        %995 = vmatpush1.msra.mxu0 %v535
        %996 = vmatprep.subr.mxu0 0.0
        %997 = vmatpush1.msra.mxu0 %v538
        %998 = vmatprep.subr.mxu0 0.0
        %999 = vmatpush1.msra.mxu0 %v541
        %1000 = vmatprep.subr.mxu0 0.0
        %1001 = vmatpush1.msra.mxu0 %v544
        %1002 = vmatprep.subr.mxu0 0.0
        %1003 = vmatpush1.msra.mxu0 %v547
        %1004 = vmatprep.subr.mxu0 0.0
        %1005 = vmatpush1.msra.mxu0 0.0
        %1006 = vmatprep.subr.mxu0 0.0
        %1007 = vmatpush1.msra.mxu0 0.0
        %1008 = vmatprep.subr.mxu0 0.0
        %1009 = vmatpush1.msra.mxu0 0.0
        %1010 = vmatprep.subr.mxu0 0.0
        %1011 = vmatpush1.msra.mxu0 0.0
        %1012 = vmatprep.subr.mxu0 0.0
        %1013 = vmatpush1.msra.mxu0 0.0
        %1014 = vmatprep.subr.mxu0 0.0
        %1015 = vmatpush1.msra.mxu0 0.0
        %1016 = vmatprep.subr.mxu0 0.0
        %1017 = vmatpush1.msra.mxu0 0.0
        %1018 = vmatprep.subr.mxu0 0.0
        %1019 = vmatpush1.msra.mxu0 0.0
        %1020 = vmatprep.subr.mxu0 0.0
        %1021 = vmatpush1.msra.mxu0 0.0
        %1022 = vmatprep.subr.mxu0 0.0
        %1023 = vmatpush1.msra.mxu0 0.0
        %1024 = vmatprep.subr.mxu0 0.0
        %1025 = vmatpush1.msra.mxu0 0.0
        %1026 = vmatprep.subr.mxu0 0.0
        %1027 = vmatpush1.msra.mxu0 0.0
        %1028 = vmatprep.subr.mxu0 0.0
        %1029 = vmatpush1.msra.mxu0 0.0
        %1030 = vmatprep.subr.mxu0 0.0
        %1031 = vmatpush1.msra.mxu0 0.0
        %1032 = vmatprep.subr.mxu0 0.0
        %1033 = vmatpush1.msra.mxu0 0.0
        %1034 = vmatprep.subr.mxu0 0.0
        %1035 = vmatpush1.msra.mxu0 0.0
        %1036 = vmatprep.mubr.f32.mxu0 0.0
        %1037 = vmatmul.mubr.f32.gmra.mrb[0].mxu0 %v892
        %v1038 = vpop.f32.mrb[0].mxu0
        %v1039 = vadd.f32 0.0, %v1038
        %v1040 = vpop.f32.mrb[0].mxu0
        %1041 = vdwg.mxu0
        %v1042 = vadd.f32 %v898, %v968
        %v1043 = vxor.u32 %v1042, 2147483648
        %v1044 = vmul.f32 %v1043, 1.442695
        %v1045 = vpow.pop %v1044
        %v1046 = vadd.f32 %v1045, 1.0
        %v1047 = vrcp.pop %v1046
        %v1048 = vmul.f32 1.0, %v1047
        %v1049 = vadd.f32 %v899, %v970
        %v1050 = vxor.u32 %v1049, 2147483648
        %v1051 = vmul.f32 %v1050, 1.442695
        %v1052 = vpow.pop %v1051
        %v1053 = vadd.f32 %v1052, 1.0
        %v1054 = vrcp.pop %v1053
        %v1055 = vmul.f32 1.0, %v1054
        %v1056 = vadd.f32 %v1039, %v553
        %v1057 = vmul.f32 %v1048, %v1056
        %v1058 = vadd.f32 %v900, %v1057
        %v1059 = vtanh.pop %v1058
        %v1060 = vsub.f32 %v892, %v1059
        %v1061 = vmul.f32 %v1055, %v1060
        %v1062 = vadd.f32 %v1059, %v1061
        %s1063 = scalar_lea.vmem %s260, 16 [#allocation7]
        %1064 = vst [vmem:[%s1063] sm:$0xff] %v1062
        %s1065 = smul.u32 3, 3
        %s1066 = smul.addr %s1065, 8
        %s1067 = scalar_lea.vmem [#allocation3], %s1066
        %v1068 = vld [vmem:[%s1067] sm:$0xff]
        %v1069 = vld [vmem:[%s1067 + $0x8] sm:$0xff]
        %v1070 = vld [vmem:[%s1067 + $0x10] sm:$0xff]
        %1071 = vmatprep.subr.mxu0 %v501
        %1072 = vmatpush1.msra.mxu0 %v500
        %1073 = vmatprep.subr.mxu0 %v504
        %1074 = vmatpush1.msra.mxu0 %v503
        %1075 = vmatprep.subr.mxu0 %v507
        %1076 = vmatpush1.msra.mxu0 %v506
        %1077 = vmatprep.subr.mxu0 %v510
        %1078 = vmatpush1.msra.mxu0 %v509
        %1079 = vmatprep.subr.mxu0 %v513
        %1080 = vmatpush1.msra.mxu0 %v512
        %1081 = vmatprep.subr.mxu0 %v516
        %1082 = vmatpush1.msra.mxu0 %v515
        %1083 = vmatprep.subr.mxu0 %v519
        %1084 = vmatpush1.msra.mxu0 %v518
        %1085 = vmatprep.subr.mxu0 %v522
        %1086 = vmatpush1.msra.mxu0 %v521
        %1087 = vmatprep.subr.mxu0 %v525
        %1088 = vmatpush1.msra.mxu0 %v524
        %1089 = vmatprep.subr.mxu0 %v528
        %1090 = vmatpush1.msra.mxu0 %v527
        %1091 = vmatprep.subr.mxu0 %v531
        %1092 = vmatpush1.msra.mxu0 %v530
        %1093 = vmatprep.subr.mxu0 %v534
        %1094 = vmatpush1.msra.mxu0 %v533
        %1095 = vmatprep.subr.mxu0 %v537
        %1096 = vmatpush1.msra.mxu0 %v536
        %1097 = vmatprep.subr.mxu0 %v540
        %1098 = vmatpush1.msra.mxu0 %v539
        %1099 = vmatprep.subr.mxu0 %v543
        %1100 = vmatpush1.msra.mxu0 %v542
        %1101 = vmatprep.subr.mxu0 %v546
        %1102 = vmatpush1.msra.mxu0 %v545
        %1103 = vmatprep.subr.mxu0 0.0
        %1104 = vmatpush1.msra.mxu0 0.0
        %1105 = vmatprep.subr.mxu0 0.0
        %1106 = vmatpush1.msra.mxu0 0.0
        %1107 = vmatprep.subr.mxu0 0.0
        %1108 = vmatpush1.msra.mxu0 0.0
        %1109 = vmatprep.subr.mxu0 0.0
        %1110 = vmatpush1.msra.mxu0 0.0
        %1111 = vmatprep.subr.mxu0 0.0
        %1112 = vmatpush1.msra.mxu0 0.0
        %1113 = vmatprep.subr.mxu0 0.0
        %1114 = vmatpush1.msra.mxu0 0.0
        %1115 = vmatprep.subr.mxu0 0.0
        %1116 = vmatpush1.msra.mxu0 0.0
        %1117 = vmatprep.subr.mxu0 0.0
        %1118 = vmatpush1.msra.mxu0 0.0
        %1119 = vmatprep.subr.mxu0 0.0
        %1120 = vmatpush1.msra.mxu0 0.0
        %1121 = vmatprep.subr.mxu0 0.0
        %1122 = vmatpush1.msra.mxu0 0.0
        %1123 = vmatprep.subr.mxu0 0.0
        %1124 = vmatpush1.msra.mxu0 0.0
        %1125 = vmatprep.subr.mxu0 0.0
        %1126 = vmatpush1.msra.mxu0 0.0
        %1127 = vmatprep.subr.mxu0 0.0
        %1128 = vmatpush1.msra.mxu0 0.0
        %1129 = vmatprep.subr.mxu0 0.0
        %1130 = vmatpush1.msra.mxu0 0.0
        %1131 = vmatprep.subr.mxu0 0.0
        %1132 = vmatpush1.msra.mxu0 0.0
        %1133 = vmatprep.subr.mxu0 0.0
        %1134 = vmatpush1.msra.mxu0 0.0
        %1135 = vmatprep.mubr.f32.mxu0 0.0
        %1136 = vmatmul.mubr.f32.gmra.mrb[0].mxu0 %v1062
        %v1137 = vpop.f32.mrb[0].mxu0
        %v1138 = vadd.f32 0.0, %v1137
        %v1139 = vpop.f32.mrb[0].mxu0
        %v1140 = vadd.f32 0.0, %v1139
        %1141 = vdwg.mxu0
        %1142 = vmatprep.subr.mxu0 0.0
        %1143 = vmatpush1.msra.mxu0 %v502
        %1144 = vmatprep.subr.mxu0 0.0
        %1145 = vmatpush1.msra.mxu0 %v505
        %1146 = vmatprep.subr.mxu0 0.0
        %1147 = vmatpush1.msra.mxu0 %v508
        %1148 = vmatprep.subr.mxu0 0.0
        %1149 = vmatpush1.msra.mxu0 %v511
        %1150 = vmatprep.subr.mxu0 0.0
        %1151 = vmatpush1.msra.mxu0 %v514
        %1152 = vmatprep.subr.mxu0 0.0
        %1153 = vmatpush1.msra.mxu0 %v517
        %1154 = vmatprep.subr.mxu0 0.0
        %1155 = vmatpush1.msra.mxu0 %v520
        %1156 = vmatprep.subr.mxu0 0.0
        %1157 = vmatpush1.msra.mxu0 %v523
        %1158 = vmatprep.subr.mxu0 0.0
        %1159 = vmatpush1.msra.mxu0 %v526
        %1160 = vmatprep.subr.mxu0 0.0
        %1161 = vmatpush1.msra.mxu0 %v529
        %1162 = vmatprep.subr.mxu0 0.0
        %1163 = vmatpush1.msra.mxu0 %v532
        %1164 = vmatprep.subr.mxu0 0.0
        %1165 = vmatpush1.msra.mxu0 %v535
        %1166 = vmatprep.subr.mxu0 0.0
        %1167 = vmatpush1.msra.mxu0 %v538
        %1168 = vmatprep.subr.mxu0 0.0
        %1169 = vmatpush1.msra.mxu0 %v541
        %1170 = vmatprep.subr.mxu0 0.0
        %1171 = vmatpush1.msra.mxu0 %v544
        %1172 = vmatprep.subr.mxu0 0.0
        %1173 = vmatpush1.msra.mxu0 %v547
        %1174 = vmatprep.subr.mxu0 0.0
        %1175 = vmatpush1.msra.mxu0 0.0
        %1176 = vmatprep.subr.mxu0 0.0
        %1177 = vmatpush1.msra.mxu0 0.0
        %1178 = vmatprep.subr.mxu0 0.0
        %1179 = vmatpush1.msra.mxu0 0.0
        %1180 = vmatprep.subr.mxu0 0.0
        %1181 = vmatpush1.msra.mxu0 0.0
        %1182 = vmatprep.subr.mxu0 0.0
        %1183 = vmatpush1.msra.mxu0 0.0
        %1184 = vmatprep.subr.mxu0 0.0
        %1185 = vmatpush1.msra.mxu0 0.0
        %1186 = vmatprep.subr.mxu0 0.0
        %1187 = vmatpush1.msra.mxu0 0.0
        %1188 = vmatprep.subr.mxu0 0.0
        %1189 = vmatpush1.msra.mxu0 0.0
        %1190 = vmatprep.subr.mxu0 0.0
        %1191 = vmatpush1.msra.mxu0 0.0
        %1192 = vmatprep.subr.mxu0 0.0
        %1193 = vmatpush1.msra.mxu0 0.0
        %1194 = vmatprep.subr.mxu0 0.0
        %1195 = vmatpush1.msra.mxu0 0.0
        %1196 = vmatprep.subr.mxu0 0.0
        %1197 = vmatpush1.msra.mxu0 0.0
        %1198 = vmatprep.subr.mxu0 0.0
        %1199 = vmatpush1.msra.mxu0 0.0
        %1200 = vmatprep.subr.mxu0 0.0
        %1201 = vmatpush1.msra.mxu0 0.0
        %1202 = vmatprep.subr.mxu0 0.0
        %1203 = vmatpush1.msra.mxu0 0.0
        %1204 = vmatprep.subr.mxu0 0.0
        %1205 = vmatpush1.msra.mxu0 0.0
        %1206 = vmatprep.mubr.f32.mxu0 0.0
        %1207 = vmatmul.mubr.f32.gmra.mrb[0].mxu0 %v1062
        %v1208 = vpop.f32.mrb[0].mxu0
        %v1209 = vadd.f32 0.0, %v1208
        %v1210 = vpop.f32.mrb[0].mxu0
        %1211 = vdwg.mxu0
        %v1212 = vadd.f32 %v1068, %v1138
        %v1213 = vxor.u32 %v1212, 2147483648
        %v1214 = vmul.f32 %v1213, 1.442695
        %v1215 = vpow.pop %v1214
        %v1216 = vadd.f32 %v1215, 1.0
        %v1217 = vrcp.pop %v1216
        %v1218 = vmul.f32 1.0, %v1217
        %v1219 = vadd.f32 %v1069, %v1140
        %v1220 = vxor.u32 %v1219, 2147483648
        %v1221 = vmul.f32 %v1220, 1.442695
        %v1222 = vpow.pop %v1221
        %v1223 = vadd.f32 %v1222, 1.0
        %v1224 = vrcp.pop %v1223
        %v1225 = vmul.f32 1.0, %v1224
        %v1226 = vadd.f32 %v1209, %v553
        %v1227 = vmul.f32 %v1218, %v1226
        %v1228 = vadd.f32 %v1070, %v1227
        %v1229 = vtanh.pop %v1228
        %v1230 = vsub.f32 %v1062, %v1229
        %v1231 = vmul.f32 %v1225, %v1230
        %v1232 = vadd.f32 %v1229, %v1231
        %s1233 = scalar_lea.vmem %s260, 24 [#allocation7]
        %1234 = vst [vmem:[%s1233] sm:$0xff] %v1232
        %1235 = vst [vmem:[#allocation2] sm:$0xff] %v1232
        %s1236 = sand.u32 %s160, 1
        %s1237 = scalar_lea.sflag [#allocation6], %s1236
        %s1238 = sand.u32 %s160, 1
        %s1239 = smul.addr %s1238, 32
        %s1240 = scalar_lea.vmem [#allocation7], %s1239
        // Predicated region
        $region53: #{tpu_custom_call.1} parent=43 // pred_check
          %p1241 = pneg %p170
        $region54: #{tpu_custom_call.1} parent=43 // pred_check_branch
          %1243 = sbr.rel (%p1241) target = $region56
        $region55: #{tpu_custom_call.1} parent=43 // pred_region
          %s1244 = smul.u32 4, %s21
          %s1246 = ssub.s32 512, 512
          %1247 = vsyncadd %s1237, %s1246
          %s1248 = smul.addr %s1244, 128
          %s1249 = scalar_lea.hbm %s6, %s1248
          %s1250 = sshll.u32 %s1240, 4
          %s1251 = int_to_ptr.vmem [resolvable:$true] %s1250
          %1256 = dma.vmem_to_hbm [thread:$0]  %s1251, 512, %s1249, %s1237, 128, 128, 8
        $region56: #{tpu_custom_call.1} parent=43 // pred_fallthru
          _
      $region44: #{tpu_custom_call.1} parent=5 // pred_fallthru
        _
      %p1257 = scmp.le.s32.totalorder 2, %s16
      // Predicated region
      $region57: #{tpu_custom_call.1} parent=5 // pred_check
        %p1258 = pneg %p1257
      $region58: #{tpu_custom_call.1} parent=5 // pred_check_branch
        %1260 = sbr.rel (%p1258) target = $region60
      $region59: #{tpu_custom_call.1} parent=5 // pred_region
        %s1261 = ssub.s32 %s16, 2
        // Predicated region
        $region61: #{tpu_custom_call.1} parent=59 // pred_check
          %p1262 = pneg %p176
        $region62: #{tpu_custom_call.1} parent=59 // pred_check_branch
          %1264 = sbr.rel (%p1262) target = $region64
        $region63: #{tpu_custom_call.1} parent=59 // pred_region
          %s1265 = sand.u32 %s161, 1
          %s1266 = scalar_lea.sflag [#allocation6], %s1265
          %s1267 = sand.u32 %s161, 1
          %s1268 = smul.addr %s1267, 32
          %s1269 = scalar_lea.vmem [#allocation7], %s1268
          %1270 = dma.done %s1266, 512
        $region64: #{tpu_custom_call.1} parent=59 // pred_fallthru
          _
      $region60: #{tpu_custom_call.1} parent=5 // pred_fallthru
        _
    $region6: #{tpu_custom_call.1} parent=1 // loop_footer
      %s20 = sadd.s32 1, %s16
    $region7: #{tpu_custom_call.1} parent=1 // loop_footer_branch
      %15 = sbr.rel target = $region3
    $region8: #{tpu_custom_call.1} parent=1 // loop_exit
      _
    %1271 = vsyncpa [#allocation5], 1
    %s1272 = scalar_lea.sflag [#allocation5], 1
    %1273 = vsyncpa %s1272, 1
    %1274 = vsyncpa [#allocation6], 1
    %s1275 = scalar_lea.sflag [#allocation6], 1
    %1276 = vsyncpa %s1275, 1

</llo_original>
